<compile_context>
chip_gen: v5e
topology: v5e:2x2
jax: 0.10.0
libtpu: 0.0.40
codegen_flags: <defaults>
</compile_context>

<pallas_src>
import functools

import jax
import jax.numpy as jnp
import numpy as np
from jax.experimental import pallas as pl
from jax.experimental.pallas import tpu as pltpu

POOL = 4
_PREC = jax.lax.Precision.HIGHEST  # exact for 0/+-1/0.25-scaled constant matrices


def _spa_kernel(org_ref, enh_ref, ah_ref, awt_ref, gwl_ref, gwr_ref,
                ghu_ref, ghd_ref, out_ref, *, bt):
    # diff first (linearity): conv(pool(mean(org))) - conv(pool(mean(enh)))
    #                       == conv(pool(mean(org - enh)))
    diff = org_ref[...].astype(jnp.float32) - enh_ref[...].astype(jnp.float32)
    chansum = jnp.sum(diff, axis=1)               # (BT, H, W); 1/C folded into ah

    ah = ah_ref[...]     # (Hp, H)  row pool, entries 1/(4*C)  (channel mean folded)
    awt = awt_ref[...]   # (W, Wp)  col pool, entries 1/4
    gwl = gwl_ref[...]   # (Wp, Wp) I - superdiag  -> x[i,j] - x[i,j-1] (zero pad)
    gwr = gwr_ref[...]   # (Wp, Wp) I - subdiag    -> x[i,j] - x[i,j+1]
    ghu = ghu_ref[...]   # (Hp, Hp) I - subdiag    -> x[i,j] - x[i-1,j]
    ghd = ghd_ref[...]   # (Hp, Hp) I - superdiag  -> x[i,j] - x[i+1,j]

    def mm(a, b):
        return jnp.dot(a, b, precision=_PREC, preferred_element_type=jnp.float32)

    for b in range(bt):                            # static unroll, bt is small
        d = mm(mm(ah, chansum[b]), awt)            # pooled diff map (Hp, Wp)
        dl = mm(d, gwl)                            # left  diff
        dr = mm(d, gwr)                            # right diff
        du = mm(ghu, d)                            # up    diff
        dd = mm(ghd, d)                            # down  diff
        out_ref[b, 0, :, :] = dl * dl + dr * dr + du * du + dd * dd


def _pick_bt(batch, c, h, w, target_bytes=2 << 20, cap=8):
    """Largest divisor of `batch` whose input block stays near `target_bytes`."""
    per_img = c * h * w * 4
    budget = max(1, target_bytes // max(per_img, 1))
    limit = int(min(cap, budget, batch))
    bt = 1
    for d in range(1, limit + 1):
        if batch % d == 0:
            bt = d
    return bt


def spa_loss(org, enhance, *, bt=None):
    B, C, H, W = org.shape
    assert enhance.shape == org.shape
    assert H % POOL == 0 and W % POOL == 0
    Hp, Wp = H // POOL, W // POOL

    if bt is None:
        bt = _pick_bt(B, C, H, W)
    assert B % bt == 0

    # Constant matrices (host-side).
    ah = jnp.repeat(jnp.eye(Hp, dtype=jnp.float32), POOL, axis=1) / (POOL * C)   # (Hp, H)
    awt = jnp.repeat(jnp.eye(Wp, dtype=jnp.float32), POOL, axis=1).T / POOL      # (W, Wp)
    eye_w = jnp.eye(Wp, dtype=jnp.float32)
    eye_h = jnp.eye(Hp, dtype=jnp.float32)
    gwl = eye_w - jnp.eye(Wp, k=1, dtype=jnp.float32)    # x - left neighbor
    gwr = eye_w - jnp.eye(Wp, k=-1, dtype=jnp.float32)   # x - right neighbor
    ghu = eye_h - jnp.eye(Hp, k=-1, dtype=jnp.float32)   # x - up neighbor
    ghd = eye_h - jnp.eye(Hp, k=1, dtype=jnp.float32)    # x - down neighbor

    def const_spec(shape):
        nd = len(shape)
        return pl.BlockSpec(shape, lambda g, _nd=nd: (0,) * _nd)

    # Raise the scoped VMEM limit only when the chosen blocks need it.
    in_block_bytes = bt * C * H * W * 4
    const_bytes = (Hp * H + W * Wp + 2 * Wp * Wp + 2 * Hp * Hp) * 4
    out_block_bytes = bt * Hp * Wp * 4
    est = 2 * 2 * in_block_bytes + 2 * out_block_bytes + 2 * const_bytes + (1 << 20)
    compiler_kwargs = dict(dimension_semantics=("parallel",))
    if est > (12 << 20):
        compiler_kwargs["vmem_limit_bytes"] = int(min(2 * est, 96 << 20))

    kernel = functools.partial(_spa_kernel, bt=bt)

    return pl.pallas_call(
        kernel,
        out_shape=jax.ShapeDtypeStruct((B, 1, Hp, Wp), jnp.float32),
        grid_spec=pltpu.PrefetchScalarGridSpec(
            num_scalar_prefetch=0,
            grid=(B // bt,),
            in_specs=[
                pl.BlockSpec((bt, C, H, W), lambda g: (g, 0, 0, 0)),
                pl.BlockSpec((bt, C, H, W), lambda g: (g, 0, 0, 0)),
                const_spec((Hp, H)),
                const_spec((W, Wp)),
                const_spec((Wp, Wp)),
                const_spec((Wp, Wp)),
                const_spec((Hp, Hp)),
                const_spec((Hp, Hp)),
            ],
            out_specs=pl.BlockSpec((bt, 1, Hp, Wp), lambda g: (g, 0, 0, 0)),
        ),
        compiler_params=pltpu.CompilerParams(**compiler_kwargs),
    )(org, enhance, ah, awt, gwl, gwr, ghu, ghd)


def spa_loss_ref(org, enhance):
    """Pure-JAX reference mirroring the PyTorch module."""
    om = jnp.mean(org, axis=1, keepdims=True)
    em = jnp.mean(enhance, axis=1, keepdims=True)

    def pool(x):
        B, _, H, W = x.shape
        return x.reshape(B, 1, H // POOL, POOL, W // POOL, POOL).mean(axis=(3, 5))

    def diffs(x):
        xp = jnp.pad(x, ((0, 0), (0, 0), (1, 1), (1, 1)))
        left = x - xp[:, :, 1:-1, :-2]
        right = x - xp[:, :, 1:-1, 2:]
        up = x - xp[:, :, :-2, 1:-1]
        down = x - xp[:, :, 2:, 1:-1]
        return left, right, up, down

    o, e = pool(om), pool(em)
    ol, orr, ou, od = diffs(o)
    el, er, eu, ed = diffs(e)
    return (ol - el) ** 2 + (orr - er) ** 2 + (ou - eu) ** 2 + (od - ed) ** 2


if __name__ == "__main__":
    key = jax.random.PRNGKey(0)
    k1, k2 = jax.random.split(key)
    org = jax.random.uniform(k1, (2, 4, 16, 16), dtype=jnp.float32)
    enhance = jax.random.uniform(k2, (2, 4, 16, 16), dtype=jnp.float32)

    out = jax.block_until_ready(spa_loss(org, enhance))
    ref = jax.block_until_ready(spa_loss_ref(org, enhance))
    np.testing.assert_allclose(np.asarray(out), np.asarray(ref),
                               atol=1e-5, rtol=1e-5)
    print("KERNEL_OK")
</pallas_src>

<mosaic_0001>
module attributes {stable_mosaic.version = 11 : i64} {
  func.func @_spa_kernel(%arg0: i32, %arg1: memref<2x4x16x16xf32, #tpu.memory_space<vmem>>, %arg2: memref<2x4x16x16xf32, #tpu.memory_space<vmem>>, %arg3: memref<4x16xf32, #tpu.memory_space<vmem>>, %arg4: memref<16x4xf32, #tpu.memory_space<vmem>>, %arg5: memref<4x4xf32, #tpu.memory_space<vmem>>, %arg6: memref<4x4xf32, #tpu.memory_space<vmem>>, %arg7: memref<4x4xf32, #tpu.memory_space<vmem>>, %arg8: memref<4x4xf32, #tpu.memory_space<vmem>>, %arg9: memref<2x1x4x4xf32, #tpu.memory_space<vmem>>) attributes {dimension_semantics = [#tpu.dimension_semantics<parallel>], iteration_bounds = array<i64: 1>, scalar_prefetch = 0 : i64, scratch_operands = 0 : i64, tpu.core_type = #tpu.core_type<tc>, window_params = [{transform_indices = @transform_0, window_bounds = array<i64: 2, 4, 16, 16>}, {transform_indices = @transform_1, window_bounds = array<i64: 2, 4, 16, 16>}, {pipeline_mode = #tpu.pipeline_mode<synchronous>, transform_indices = @transform_2, window_bounds = array<i64: 4, 16>}, {pipeline_mode = #tpu.pipeline_mode<synchronous>, transform_indices = @transform_3, window_bounds = array<i64: 16, 4>}, {pipeline_mode = #tpu.pipeline_mode<synchronous>, transform_indices = @transform_4, window_bounds = array<i64: 4, 4>}, {pipeline_mode = #tpu.pipeline_mode<synchronous>, transform_indices = @transform_5, window_bounds = array<i64: 4, 4>}, {pipeline_mode = #tpu.pipeline_mode<synchronous>, transform_indices = @transform_6, window_bounds = array<i64: 4, 4>}, {pipeline_mode = #tpu.pipeline_mode<synchronous>, transform_indices = @transform_7, window_bounds = array<i64: 4, 4>}, {transform_indices = @transform_8, window_bounds = array<i64: 2, 1, 4, 4>}]} {
    %c0 = arith.constant 0 : index
    %c0_0 = arith.constant 0 : index
    %c0_1 = arith.constant 0 : index
    %c0_2 = arith.constant 0 : index
    %0 = vector.load %arg1[%c0, %c0_0, %c0_1, %c0_2] : memref<2x4x16x16xf32, #tpu.memory_space<vmem>>, vector<2x4x16x16xf32>
    %c0_3 = arith.constant 0 : index
    %c0_4 = arith.constant 0 : index
    %c0_5 = arith.constant 0 : index
    %c0_6 = arith.constant 0 : index
    %1 = vector.load %arg2[%c0_3, %c0_4, %c0_5, %c0_6] : memref<2x4x16x16xf32, #tpu.memory_space<vmem>>, vector<2x4x16x16xf32>
    %2 = arith.subf %0, %1 : vector<2x4x16x16xf32>
    %cst = arith.constant dense<0.000000e+00> : vector<2x16x16xf32>
    %3 = vector.multi_reduction <add>, %2, %cst [1] : vector<2x4x16x16xf32> to vector<2x16x16xf32>
    %c0_7 = arith.constant 0 : index
    %c0_8 = arith.constant 0 : index
    %4 = vector.load %arg3[%c0_7, %c0_8] : memref<4x16xf32, #tpu.memory_space<vmem>>, vector<4x16xf32>
    %c0_9 = arith.constant 0 : index
    %c0_10 = arith.constant 0 : index
    %5 = vector.load %arg4[%c0_9, %c0_10] : memref<16x4xf32, #tpu.memory_space<vmem>>, vector<16x4xf32>
    %c0_11 = arith.constant 0 : index
    %c0_12 = arith.constant 0 : index
    %6 = vector.load %arg5[%c0_11, %c0_12] : memref<4x4xf32, #tpu.memory_space<vmem>>, vector<4x4xf32>
    %c0_13 = arith.constant 0 : index
    %c0_14 = arith.constant 0 : index
    %7 = vector.load %arg6[%c0_13, %c0_14] : memref<4x4xf32, #tpu.memory_space<vmem>>, vector<4x4xf32>
    %c0_15 = arith.constant 0 : index
    %c0_16 = arith.constant 0 : index
    %8 = vector.load %arg7[%c0_15, %c0_16] : memref<4x4xf32, #tpu.memory_space<vmem>>, vector<4x4xf32>
    %c0_17 = arith.constant 0 : index
    %c0_18 = arith.constant 0 : index
    %9 = vector.load %arg8[%c0_17, %c0_18] : memref<4x4xf32, #tpu.memory_space<vmem>>, vector<4x4xf32>
    %10 = vector.extract_strided_slice %3 {offsets = [0, 0, 0], sizes = [1, 16, 16], strides = [1, 1, 1]} : vector<2x16x16xf32> to vector<1x16x16xf32>
    %11 = vector.shape_cast %10 : vector<1x16x16xf32> to vector<16x16xf32>
    %cst_19 = arith.constant dense<0.000000e+00> : vector<4x16xf32>
    %12 = tpu.matmul %4, %11, %cst_19 {dimension_numbers = #tpu.dot_dimension_numbers<[1], [0], [0], [1], [0, 0, 1, 1], [], []>, precision = #tpu.contract_precision<fp32>} : vector<4x16xf32>, vector<16x16xf32>, vector<4x16xf32> -> vector<4x16xf32>
    %cst_20 = arith.constant dense<0.000000e+00> : vector<4x4xf32>
    %13 = tpu.matmul %12, %5, %cst_20 {dimension_numbers = #tpu.dot_dimension_numbers<[1], [0], [0], [1], [0, 0, 1, 1], [], []>, precision = #tpu.contract_precision<fp32>} : vector<4x16xf32>, vector<16x4xf32>, vector<4x4xf32> -> vector<4x4xf32>
    %cst_21 = arith.constant dense<0.000000e+00> : vector<4x4xf32>
    %14 = tpu.matmul %13, %6, %cst_21 {dimension_numbers = #tpu.dot_dimension_numbers<[1], [0], [0], [1], [0, 0, 1, 1], [], []>, precision = #tpu.contract_precision<fp32>} : vector<4x4xf32>, vector<4x4xf32>, vector<4x4xf32> -> vector<4x4xf32>
    %cst_22 = arith.constant dense<0.000000e+00> : vector<4x4xf32>
    %15 = tpu.matmul %13, %7, %cst_22 {dimension_numbers = #tpu.dot_dimension_numbers<[1], [0], [0], [1], [0, 0, 1, 1], [], []>, precision = #tpu.contract_precision<fp32>} : vector<4x4xf32>, vector<4x4xf32>, vector<4x4xf32> -> vector<4x4xf32>
    %cst_23 = arith.constant dense<0.000000e+00> : vector<4x4xf32>
    %16 = tpu.matmul %8, %13, %cst_23 {dimension_numbers = #tpu.dot_dimension_numbers<[1], [0], [0], [1], [0, 0, 1, 1], [], []>, precision = #tpu.contract_precision<fp32>} : vector<4x4xf32>, vector<4x4xf32>, vector<4x4xf32> -> vector<4x4xf32>
    %cst_24 = arith.constant dense<0.000000e+00> : vector<4x4xf32>
    %17 = tpu.matmul %9, %13, %cst_24 {dimension_numbers = #tpu.dot_dimension_numbers<[1], [0], [0], [1], [0, 0, 1, 1], [], []>, precision = #tpu.contract_precision<fp32>} : vector<4x4xf32>, vector<4x4xf32>, vector<4x4xf32> -> vector<4x4xf32>
    %18 = arith.mulf %14, %14 : vector<4x4xf32>
    %19 = arith.mulf %15, %15 : vector<4x4xf32>
    %20 = arith.addf %18, %19 : vector<4x4xf32>
    %21 = arith.mulf %16, %16 : vector<4x4xf32>
    %22 = arith.addf %20, %21 : vector<4x4xf32>
    %23 = arith.mulf %17, %17 : vector<4x4xf32>
    %24 = arith.addf %22, %23 : vector<4x4xf32>
    %c0_25 = arith.constant 0 : index
    %c0_26 = arith.constant 0 : index
    %c0_27 = arith.constant 0 : index
    %c0_28 = arith.constant 0 : index
    %25 = vector.load %arg9[%c0_25, %c0_26, %c0_27, %c0_28] : memref<2x1x4x4xf32, #tpu.memory_space<vmem>>, vector<1x1x4x4xf32>
    %26 = vector.shape_cast %25 : vector<1x1x4x4xf32> to vector<4x4xf32>
    %27 = vector.shape_cast %24 : vector<4x4xf32> to vector<1x1x4x4xf32>
    tpu.vector_store %arg9[%c0_25, %c0_26, %c0_27, %c0_28], %27 {strides = array<i32>} : memref<2x1x4x4xf32, #tpu.memory_space<vmem>>, vector<1x1x4x4xf32>,
    %28 = vector.extract_strided_slice %3 {offsets = [1, 0, 0], sizes = [1, 16, 16], strides = [1, 1, 1]} : vector<2x16x16xf32> to vector<1x16x16xf32>
    %29 = vector.shape_cast %28 : vector<1x16x16xf32> to vector<16x16xf32>
    %cst_29 = arith.constant dense<0.000000e+00> : vector<4x16xf32>
    %30 = tpu.matmul %4, %29, %cst_29 {dimension_numbers = #tpu.dot_dimension_numbers<[1], [0], [0], [1], [0, 0, 1, 1], [], []>, precision = #tpu.contract_precision<fp32>} : vector<4x16xf32>, vector<16x16xf32>, vector<4x16xf32> -> vector<4x16xf32>
    %cst_30 = arith.constant dense<0.000000e+00> : vector<4x4xf32>
    %31 = tpu.matmul %30, %5, %cst_30 {dimension_numbers = #tpu.dot_dimension_numbers<[1], [0], [0], [1], [0, 0, 1, 1], [], []>, precision = #tpu.contract_precision<fp32>} : vector<4x16xf32>, vector<16x4xf32>, vector<4x4xf32> -> vector<4x4xf32>
    %cst_31 = arith.constant dense<0.000000e+00> : vector<4x4xf32>
    %32 = tpu.matmul %31, %6, %cst_31 {dimension_numbers = #tpu.dot_dimension_numbers<[1], [0], [0], [1], [0, 0, 1, 1], [], []>, precision = #tpu.contract_precision<fp32>} : vector<4x4xf32>, vector<4x4xf32>, vector<4x4xf32> -> vector<4x4xf32>
    %cst_32 = arith.constant dense<0.000000e+00> : vector<4x4xf32>
    %33 = tpu.matmul %31, %7, %cst_32 {dimension_numbers = #tpu.dot_dimension_numbers<[1], [0], [0], [1], [0, 0, 1, 1], [], []>, precision = #tpu.contract_precision<fp32>} : vector<4x4xf32>, vector<4x4xf32>, vector<4x4xf32> -> vector<4x4xf32>
    %cst_33 = arith.constant dense<0.000000e+00> : vector<4x4xf32>
    %34 = tpu.matmul %8, %31, %cst_33 {dimension_numbers = #tpu.dot_dimension_numbers<[1], [0], [0], [1], [0, 0, 1, 1], [], []>, precision = #tpu.contract_precision<fp32>} : vector<4x4xf32>, vector<4x4xf32>, vector<4x4xf32> -> vector<4x4xf32>
    %cst_34 = arith.constant dense<0.000000e+00> : vector<4x4xf32>
    %35 = tpu.matmul %9, %31, %cst_34 {dimension_numbers = #tpu.dot_dimension_numbers<[1], [0], [0], [1], [0, 0, 1, 1], [], []>, precision = #tpu.contract_precision<fp32>} : vector<4x4xf32>, vector<4x4xf32>, vector<4x4xf32> -> vector<4x4xf32>
    %36 = arith.mulf %32, %32 : vector<4x4xf32>
    %37 = arith.mulf %33, %33 : vector<4x4xf32>
    %38 = arith.addf %36, %37 : vector<4x4xf32>
    %39 = arith.mulf %34, %34 : vector<4x4xf32>
    %40 = arith.addf %38, %39 : vector<4x4xf32>
    %41 = arith.mulf %35, %35 : vector<4x4xf32>
    %42 = arith.addf %40, %41 : vector<4x4xf32>
    %c1 = arith.constant 1 : index
    %c0_35 = arith.constant 0 : index
    %c0_36 = arith.constant 0 : index
    %c0_37 = arith.constant 0 : index
    %43 = vector.load %arg9[%c1, %c0_35, %c0_36, %c0_37] : memref<2x1x4x4xf32, #tpu.memory_space<vmem>>, vector<1x1x4x4xf32>
    %44 = vector.shape_cast %43 : vector<1x1x4x4xf32> to vector<4x4xf32>
    %45 = vector.shape_cast %42 : vector<4x4xf32> to vector<1x1x4x4xf32>
    tpu.vector_store %arg9[%c1, %c0_35, %c0_36, %c0_37], %45 {strides = array<i32>} : memref<2x1x4x4xf32, #tpu.memory_space<vmem>>, vector<1x1x4x4xf32>,
    return
  }
  func.func @transform_0(%arg0: i32) -> (i32, i32, i32, i32) {
    %c0_i32 = arith.constant 0 : i32
    %c0_i32_0 = arith.constant 0 : i32
    %c0_i32_1 = arith.constant 0 : i32
    %c0_i32_2 = arith.constant 0 : i32
    return %arg0, %c0_i32, %c0_i32_0, %c0_i32_1 : i32, i32, i32, i32
  }
  func.func @transform_1(%arg0: i32) -> (i32, i32, i32, i32) {
    %c0_i32 = arith.constant 0 : i32
    %c0_i32_0 = arith.constant 0 : i32
    %c0_i32_1 = arith.constant 0 : i32
    %c0_i32_2 = arith.constant 0 : i32
    return %arg0, %c0_i32, %c0_i32_0, %c0_i32_1 : i32, i32, i32, i32
  }
  func.func @transform_2(%arg0: i32) -> (i32, i32) {
    %c0_i32 = arith.constant 0 : i32
    %c0_i32_0 = arith.constant 0 : i32
    %c0_i32_1 = arith.constant 0 : i32
    return %c0_i32, %c0_i32_0 : i32, i32
  }
  func.func @transform_3(%arg0: i32) -> (i32, i32) {
    %c0_i32 = arith.constant 0 : i32
    %c0_i32_0 = arith.constant 0 : i32
    %c0_i32_1 = arith.constant 0 : i32
    return %c0_i32, %c0_i32_0 : i32, i32
  }
  func.func @transform_4(%arg0: i32) -> (i32, i32) {
    %c0_i32 = arith.constant 0 : i32
    %c0_i32_0 = arith.constant 0 : i32
    %c0_i32_1 = arith.constant 0 : i32
    return %c0_i32, %c0_i32_0 : i32, i32
  }
  func.func @transform_5(%arg0: i32) -> (i32, i32) {
    %c0_i32 = arith.constant 0 : i32
    %c0_i32_0 = arith.constant 0 : i32
    %c0_i32_1 = arith.constant 0 : i32
    return %c0_i32, %c0_i32_0 : i32, i32
  }
  func.func @transform_6(%arg0: i32) -> (i32, i32) {
    %c0_i32 = arith.constant 0 : i32
    %c0_i32_0 = arith.constant 0 : i32
    %c0_i32_1 = arith.constant 0 : i32
    return %c0_i32, %c0_i32_0 : i32, i32
  }
  func.func @transform_7(%arg0: i32) -> (i32, i32) {
    %c0_i32 = arith.constant 0 : i32
    %c0_i32_0 = arith.constant 0 : i32
    %c0_i32_1 = arith.constant 0 : i32
    return %c0_i32, %c0_i32_0 : i32, i32
  }
  func.func @transform_8(%arg0: i32) -> (i32, i32, i32, i32) {
    %c0_i32 = arith.constant 0 : i32
    %c0_i32_0 = arith.constant 0 : i32
    %c0_i32_1 = arith.constant 0 : i32
    %c0_i32_2 = arith.constant 0 : i32
    return %arg0, %c0_i32, %c0_i32_0, %c0_i32_1 : i32, i32, i32, i32
  }
}

</mosaic_0001>

<llo_original>
// kernel: tpu_custom_call.1
$region0: #{tpu_custom_call.1}
  #allocation0 [shape = 'u32[]', space=smem, size = 0x4, offset = 0x4, fixed_abs, tag = 'smem constant byte address 0x4 - core index']
  #allocation1 [shape = 'u32[72,128]{1,0:T(1,128)}', space=vmem, size = 0x9000, scoped, tag = 'internal scratch']
  %s0 = inlined_call_operand.hbm [shape: f32[2,4,16,16], index: 0, kind: input, shape index: {}]
  %s1 = inlined_call_operand.hbm [shape: f32[2,4,16,16], index: 1, kind: input, shape index: {}]
  %s2 = inlined_call_operand.vmem [shape: f32[4,16], index: 2, kind: input, shape index: {}]
  %s3 = inlined_call_operand.vmem [shape: f32[16,4], index: 3, kind: input, shape index: {}]
  %s4 = inlined_call_operand.vmem [shape: f32[4,4], index: 4, kind: input, shape index: {}]
  %s5 = inlined_call_operand.vmem [shape: f32[4,4], index: 5, kind: input, shape index: {}]
  %s6 = inlined_call_operand.vmem [shape: f32[4,4], index: 6, kind: input, shape index: {}]
  %s7 = inlined_call_operand.vmem [shape: f32[4,4], index: 7, kind: input, shape index: {}]
  %s8 = inlined_call_operand.hbm [shape: f32[2,1,4,4], index: 8, kind: output, shape index: {}]
  %s9 = sld [smem:[#allocation0]]
  $region50: #{tpu_custom_call.1} parent=0
    _
  %s11 = ssub.s32 1, %s9
  %s12 = scalar_select 0, %s11, %s9
  $region1: #{tpu_custom_call.1} parent=0
    #allocation2 [shape = 'u8[65536]{0}', space=vmem, size = 0x10000, scoped, tag = 'input window, operand 0, single buffered']
    #allocation3 [shape = 's32[1]{0}', space=sflag, size = 0x4, scoped, tag = 'scoped memory for tpu_custom_call.1']
    #allocation4 [shape = 's32[1]{0}', space=sflag, size = 0x4, scoped, tag = 'scoped memory for tpu_custom_call.1']
    #allocation5 [shape = 'u8[65536]{0}', space=vmem, size = 0x10000, scoped, tag = 'input window, operand 1, single buffered']
    #allocation6 [shape = 's32[1]{0}', space=sflag, size = 0x4, scoped, tag = 'scoped memory for tpu_custom_call.1']
    #allocation7 [shape = 'u8[4096]{0}', space=vmem, size = 0x1000, scoped, tag = 'output window, operand 0, single buffered']
    %13 = vsyncpa [#allocation3], 0
    %14 = vsyncpa [#allocation6], 0
    %15 = vsyncpa [#allocation4], 0
    // Predicated region
    $region2: #{tpu_custom_call.1} parent=1 // pred_check
      _
    $region3: #{tpu_custom_call.1} parent=1 // pred_check_branch
      %17 = sbr.rel (0) target = $region5
    $region4: #{tpu_custom_call.1} parent=1 // pred_region
      %19 = vsyncadd [#allocation3], 0
      %s20 = sshll.u32 %s0, 4
      %s21 = int_to_ptr.hbm [resolvable:$true] %s20
      %s22 = sshll.u32 [#allocation2], 4
      %s23 = int_to_ptr.vmem [resolvable:$true] %s22
      %28 = dma.hbm_to_vmem [thread:$0]  %s21, 2048, %s23, [#allocation3], 128, 128, 8
    $region5: #{tpu_custom_call.1} parent=1 // pred_fallthru
      _
    // Predicated region
    $region6: #{tpu_custom_call.1} parent=1 // pred_check
      _
    $region7: #{tpu_custom_call.1} parent=1 // pred_check_branch
      %30 = sbr.rel (0) target = $region9
    $region8: #{tpu_custom_call.1} parent=1 // pred_region
      %32 = vsyncadd [#allocation6], 0
      %s33 = sshll.u32 %s1, 4
      %s34 = int_to_ptr.hbm [resolvable:$true] %s33
      %s35 = sshll.u32 [#allocation5], 4
      %s36 = int_to_ptr.vmem [resolvable:$true] %s35
      %41 = dma.hbm_to_vmem [thread:$0]  %s34, 2048, %s36, [#allocation6], 128, 128, 8
    $region9: #{tpu_custom_call.1} parent=1 // pred_fallthru
      _
    // Predicated region
    $region10: #{tpu_custom_call.1} parent=1 // pred_check
      _
    $region11: #{tpu_custom_call.1} parent=1 // pred_check_branch
      %43 = sbr.rel (0) target = $region13
    $region12: #{tpu_custom_call.1} parent=1 // pred_region
      _
    $region13: #{tpu_custom_call.1} parent=1 // pred_fallthru
      _
    // Predicated region
    $region14: #{tpu_custom_call.1} parent=1 // pred_check
      _
    $region15: #{tpu_custom_call.1} parent=1 // pred_check_branch
      %45 = sbr.rel (0) target = $region17
    $region16: #{tpu_custom_call.1} parent=1 // pred_region
      _
    $region17: #{tpu_custom_call.1} parent=1 // pred_fallthru
      _
    // Predicated region
    $region18: #{tpu_custom_call.1} parent=1 // pred_check
      _
    $region19: #{tpu_custom_call.1} parent=1 // pred_check_branch
      %47 = sbr.rel (0) target = $region21
    $region20: #{tpu_custom_call.1} parent=1 // pred_region
      _
    $region21: #{tpu_custom_call.1} parent=1 // pred_fallthru
      _
    // Predicated region
    $region22: #{tpu_custom_call.1} parent=1 // pred_check
      _
    $region23: #{tpu_custom_call.1} parent=1 // pred_check_branch
      %49 = sbr.rel (0) target = $region25
    $region24: #{tpu_custom_call.1} parent=1 // pred_region
      _
    $region25: #{tpu_custom_call.1} parent=1 // pred_fallthru
      _
    // Predicated region
    $region26: #{tpu_custom_call.1} parent=1 // pred_check
      _
    $region27: #{tpu_custom_call.1} parent=1 // pred_check_branch
      %51 = sbr.rel (0) target = $region29
    $region28: #{tpu_custom_call.1} parent=1 // pred_region
      _
    $region29: #{tpu_custom_call.1} parent=1 // pred_fallthru
      _
    // Predicated region
    $region30: #{tpu_custom_call.1} parent=1 // pred_check
      _
    $region31: #{tpu_custom_call.1} parent=1 // pred_check_branch
      %53 = sbr.rel (0) target = $region33
    $region32: #{tpu_custom_call.1} parent=1 // pred_region
      _
    $region33: #{tpu_custom_call.1} parent=1 // pred_fallthru
      _
    // Predicated region
    $region34: #{tpu_custom_call.1} parent=1 // pred_check
      _
    $region35: #{tpu_custom_call.1} parent=1 // pred_check_branch
      %55 = sbr.rel (0) target = $region37
    $region36: #{tpu_custom_call.1} parent=1 // pred_region
      %57 = dma.done [#allocation3], 2048
    $region37: #{tpu_custom_call.1} parent=1 // pred_fallthru
      _
    // Predicated region
    $region38: #{tpu_custom_call.1} parent=1 // pred_check
      _
    $region39: #{tpu_custom_call.1} parent=1 // pred_check_branch
      %59 = sbr.rel (0) target = $region41
    $region40: #{tpu_custom_call.1} parent=1 // pred_region
      %61 = dma.done [#allocation6], 2048
    $region41: #{tpu_custom_call.1} parent=1 // pred_fallthru
      _
    %v62 = vld [vmem:[#allocation2] sm:$0xff]
    %v63 = vld [vmem:[#allocation2 + $0x8] sm:$0xff]
    %v64 = vld [vmem:[#allocation2 + $0x10] sm:$0xff]
    %v65 = vld [vmem:[#allocation2 + $0x18] sm:$0xff]
    %v66 = vld [vmem:[#allocation2 + $0x20] sm:$0xff]
    %v67 = vld [vmem:[#allocation2 + $0x28] sm:$0xff]
    %v68 = vld [vmem:[#allocation2 + $0x30] sm:$0xff]
    %v69 = vld [vmem:[#allocation2 + $0x38] sm:$0xff]
    %v70 = vld [vmem:[#allocation2 + $0x40] sm:$0xff]
    %v71 = vld [vmem:[#allocation2 + $0x48] sm:$0xff]
    %v72 = vld [vmem:[#allocation2 + $0x50] sm:$0xff]
    %v73 = vld [vmem:[#allocation2 + $0x58] sm:$0xff]
    %v74 = vld [vmem:[#allocation2 + $0x60] sm:$0xff]
    %v75 = vld [vmem:[#allocation2 + $0x68] sm:$0xff]
    %v76 = vld [vmem:[#allocation2 + $0x70] sm:$0xff]
    %v77 = vld [vmem:[#allocation2 + $0x78] sm:$0xff]
    %v78 = vld [vmem:[#allocation5] sm:$0xff]
    %v79 = vld [vmem:[#allocation5 + $0x8] sm:$0xff]
    %v80 = vld [vmem:[#allocation5 + $0x10] sm:$0xff]
    %v81 = vld [vmem:[#allocation5 + $0x18] sm:$0xff]
    %v82 = vld [vmem:[#allocation5 + $0x20] sm:$0xff]
    %v83 = vld [vmem:[#allocation5 + $0x28] sm:$0xff]
    %v84 = vld [vmem:[#allocation5 + $0x30] sm:$0xff]
    %v85 = vld [vmem:[#allocation5 + $0x38] sm:$0xff]
    %v86 = vld [vmem:[#allocation5 + $0x40] sm:$0xff]
    %v87 = vld [vmem:[#allocation5 + $0x48] sm:$0xff]
    %v88 = vld [vmem:[#allocation5 + $0x50] sm:$0xff]
    %v89 = vld [vmem:[#allocation5 + $0x58] sm:$0xff]
    %v90 = vld [vmem:[#allocation5 + $0x60] sm:$0xff]
    %v91 = vld [vmem:[#allocation5 + $0x68] sm:$0xff]
    %v92 = vld [vmem:[#allocation5 + $0x70] sm:$0xff]
    %v93 = vld [vmem:[#allocation5 + $0x78] sm:$0xff]
    %v94 = vsub.f32 %v62, %v78
    %v95 = vsub.f32 %v63, %v79
    %v96 = vsub.f32 %v64, %v80
    %v97 = vsub.f32 %v65, %v81
    %v98 = vsub.f32 %v66, %v82
    %v99 = vsub.f32 %v67, %v83
    %v100 = vsub.f32 %v68, %v84
    %v101 = vsub.f32 %v69, %v85
    %v102 = vsub.f32 %v70, %v86
    %v103 = vsub.f32 %v71, %v87
    %v104 = vsub.f32 %v72, %v88
    %v105 = vsub.f32 %v73, %v89
    %v106 = vsub.f32 %v74, %v90
    %v107 = vsub.f32 %v75, %v91
    %v108 = vsub.f32 %v76, %v92
    %v109 = vsub.f32 %v77, %v93
    %vm110 = vcmask 130048
    %v111 = vsel %vm110, %v94, 0.0
    %v112 = vsel %vm110, %v96, 0.0
    %v113 = vadd.f32 %v111, %v112
    %v114 = vsel %vm110, %v98, 0.0
    %v115 = vadd.f32 %v113, %v114
    %v116 = vsel %vm110, %v100, 0.0
    %v117 = vadd.f32 %v115, %v116
    %v118 = vsel %vm110, %v95, 0.0
    %v119 = vsel %vm110, %v97, 0.0
    %v120 = vadd.f32 %v118, %v119
    %v121 = vsel %vm110, %v99, 0.0
    %v122 = vadd.f32 %v120, %v121
    %v123 = vsel %vm110, %v101, 0.0
    %v124 = vadd.f32 %v122, %v123
    %v125 = vsel %vm110, %v102, 0.0
    %v126 = vsel %vm110, %v104, 0.0
    %v127 = vadd.f32 %v125, %v126
    %v128 = vsel %vm110, %v106, 0.0
    %v129 = vadd.f32 %v127, %v128
    %v130 = vsel %vm110, %v108, 0.0
    %v131 = vadd.f32 %v129, %v130
    %v132 = vsel %vm110, %v103, 0.0
    %v133 = vsel %vm110, %v105, 0.0
    %v134 = vadd.f32 %v132, %v133
    %v135 = vsel %vm110, %v107, 0.0
    %v136 = vadd.f32 %v134, %v135
    %v137 = vsel %vm110, %v109, 0.0
    %v138 = vadd.f32 %v136, %v137
    %v139 = vld [vmem:[%s2] sm:$0xf]
    %v140 = vld [vmem:[%s3] sm:$0xff]
    %v141 = vld [vmem:[%s3 + $0x8] sm:$0xff]
    %v142 = vld [vmem:[%s4] sm:$0xf]
    %v143 = vld [vmem:[%s5] sm:$0xf]
    %v144 = vld [vmem:[%s6] sm:$0xf]
    %v145 = vld [vmem:[%s7] sm:$0xf]
    %v147 = vsel %vm110, %v139, 0
    %149 = vmatpush.msra.mxu0 0.0
    %150 = vmatpush.msra.mxu0 0.0
    %151 = vmatpush.msra.mxu0 0.0
    %152 = vmatpush.msra.mxu0 0.0
    %153 = vmatpush.msra.mxu0 0.0
    %154 = vmatpush.msra.mxu0 0.0
    %155 = vmatpush.msra.mxu0 0.0
    %156 = vmatpush.msra.mxu0 0.0
    %157 = vmatpush.msra.mxu0 0.0
    %158 = vmatpush.msra.mxu0 0.0
    %159 = vmatpush.msra.mxu0 0.0
    %160 = vmatpush.msra.mxu0 0.0
    %161 = vmatpush.msra.mxu0 0.0
    %162 = vmatpush.msra.mxu0 0.0
    %v163 = vand.u32 %v124, 4294901760
    %164 = vmatpush.msra.mxu0 %v163
    %v165 = vand.u32 %v117, 4294901760
    %166 = vmatpush.msra.mxu0 %v165
    %v167 = vand.u32 %v147, 4294901760
    %v168 = vsub.f32 %v147, %v167
    %v169 = vand.u32 %v168, 4294901760
    %v170 = vsub.f32 %v168, %v169
    %v171 = vand.u32 %v170, 4294901760
    %172 = vmatmul.f32.gmra.mxu0 %v171
    %v173 = vpop.f32.mrf.mxu0
    %v174 = vadd.f32 0.0, %v173
    %175 = vdwg.mxu0
    %176 = vmatpush.msra.mxu0 0.0
    %177 = vmatpush.msra.mxu0 0.0
    %178 = vmatpush.msra.mxu0 0.0
    %179 = vmatpush.msra.mxu0 0.0
    %180 = vmatpush.msra.mxu0 0.0
    %181 = vmatpush.msra.mxu0 0.0
    %182 = vmatpush.msra.mxu0 0.0
    %183 = vmatpush.msra.mxu0 0.0
    %184 = vmatpush.msra.mxu0 0.0
    %185 = vmatpush.msra.mxu0 0.0
    %186 = vmatpush.msra.mxu0 0.0
    %187 = vmatpush.msra.mxu0 0.0
    %188 = vmatpush.msra.mxu0 0.0
    %189 = vmatpush.msra.mxu0 0.0
    %v190 = vand.u32 %v124, 4294901760
    %v191 = vsub.f32 %v124, %v190
    %v192 = vand.u32 %v191, 4294901760
    %v193 = vsub.f32 %v191, %v192
    %v194 = vand.u32 %v193, 4294901760
    %195 = vmatpush.msra.mxu0 %v194
    %v196 = vand.u32 %v117, 4294901760
    %v197 = vsub.f32 %v117, %v196
    %v198 = vand.u32 %v197, 4294901760
    %v199 = vsub.f32 %v197, %v198
    %v200 = vand.u32 %v199, 4294901760
    %201 = vmatpush.msra.mxu0 %v200
    %v202 = vand.u32 %v147, 4294901760
    %203 = vmatmul.f32.gmra.mxu0 %v202
    %v204 = vpop.f32.mrf.mxu0
    %v205 = vadd.f32 %v174, %v204
    %206 = vdwg.mxu0
    %207 = vmatpush.msra.mxu0 0.0
    %208 = vmatpush.msra.mxu0 0.0
    %209 = vmatpush.msra.mxu0 0.0
    %210 = vmatpush.msra.mxu0 0.0
    %211 = vmatpush.msra.mxu0 0.0
    %212 = vmatpush.msra.mxu0 0.0
    %213 = vmatpush.msra.mxu0 0.0
    %214 = vmatpush.msra.mxu0 0.0
    %215 = vmatpush.msra.mxu0 0.0
    %216 = vmatpush.msra.mxu0 0.0
    %217 = vmatpush.msra.mxu0 0.0
    %218 = vmatpush.msra.mxu0 0.0
    %219 = vmatpush.msra.mxu0 0.0
    %220 = vmatpush.msra.mxu0 0.0
    %v221 = vand.u32 %v124, 4294901760
    %v222 = vsub.f32 %v124, %v221
    %223 = vmatpush.msra.mxu0 %v222
    %v224 = vand.u32 %v117, 4294901760
    %v225 = vsub.f32 %v117, %v224
    %226 = vmatpush.msra.mxu0 %v225
    %v227 = vand.u32 %v147, 4294901760
    %v228 = vsub.f32 %v147, %v227
    %229 = vmatmul.f32.gmra.mxu0 %v228
    %v230 = vpop.f32.mrf.mxu0
    %v231 = vadd.f32 %v205, %v230
    %232 = vdwg.mxu0
    %233 = vmatpush.msra.mxu0 0.0
    %234 = vmatpush.msra.mxu0 0.0
    %235 = vmatpush.msra.mxu0 0.0
    %236 = vmatpush.msra.mxu0 0.0
    %237 = vmatpush.msra.mxu0 0.0
    %238 = vmatpush.msra.mxu0 0.0
    %239 = vmatpush.msra.mxu0 0.0
    %240 = vmatpush.msra.mxu0 0.0
    %241 = vmatpush.msra.mxu0 0.0
    %242 = vmatpush.msra.mxu0 0.0
    %243 = vmatpush.msra.mxu0 0.0
    %244 = vmatpush.msra.mxu0 0.0
    %245 = vmatpush.msra.mxu0 0.0
    %246 = vmatpush.msra.mxu0 0.0
    %v247 = vand.u32 %v124, 4294901760
    %248 = vmatpush.msra.mxu0 %v247
    %v249 = vand.u32 %v117, 4294901760
    %250 = vmatpush.msra.mxu0 %v249
    %v251 = vand.u32 %v147, 4294901760
    %v252 = vsub.f32 %v147, %v251
    %v253 = vand.u32 %v252, 4294901760
    %254 = vmatmul.f32.gmra.mxu0 %v253
    %v255 = vpop.f32.mrf.mxu0
    %v256 = vadd.f32 %v231, %v255
    %257 = vdwg.mxu0
    %258 = vmatpush.msra.mxu0 0.0
    %259 = vmatpush.msra.mxu0 0.0
    %260 = vmatpush.msra.mxu0 0.0
    %261 = vmatpush.msra.mxu0 0.0
    %262 = vmatpush.msra.mxu0 0.0
    %263 = vmatpush.msra.mxu0 0.0
    %264 = vmatpush.msra.mxu0 0.0
    %265 = vmatpush.msra.mxu0 0.0
    %266 = vmatpush.msra.mxu0 0.0
    %267 = vmatpush.msra.mxu0 0.0
    %268 = vmatpush.msra.mxu0 0.0
    %269 = vmatpush.msra.mxu0 0.0
    %270 = vmatpush.msra.mxu0 0.0
    %271 = vmatpush.msra.mxu0 0.0
    %v272 = vand.u32 %v124, 4294901760
    %v273 = vsub.f32 %v124, %v272
    %v274 = vand.u32 %v273, 4294901760
    %275 = vmatpush.msra.mxu0 %v274
    %v276 = vand.u32 %v117, 4294901760
    %v277 = vsub.f32 %v117, %v276
    %v278 = vand.u32 %v277, 4294901760
    %279 = vmatpush.msra.mxu0 %v278
    %v280 = vand.u32 %v147, 4294901760
    %281 = vmatmul.f32.gmra.mxu0 %v280
    %v282 = vpop.f32.mrf.mxu0
    %v283 = vadd.f32 %v256, %v282
    %284 = vdwg.mxu0
    %285 = vmatpush.msra.mxu0 0.0
    %286 = vmatpush.msra.mxu0 0.0
    %287 = vmatpush.msra.mxu0 0.0
    %288 = vmatpush.msra.mxu0 0.0
    %289 = vmatpush.msra.mxu0 0.0
    %290 = vmatpush.msra.mxu0 0.0
    %291 = vmatpush.msra.mxu0 0.0
    %292 = vmatpush.msra.mxu0 0.0
    %293 = vmatpush.msra.mxu0 0.0
    %294 = vmatpush.msra.mxu0 0.0
    %295 = vmatpush.msra.mxu0 0.0
    %296 = vmatpush.msra.mxu0 0.0
    %297 = vmatpush.msra.mxu0 0.0
    %298 = vmatpush.msra.mxu0 0.0
    %v299 = vand.u32 %v124, 4294901760
    %300 = vmatpush.msra.mxu0 %v299
    %v301 = vand.u32 %v117, 4294901760
    %302 = vmatpush.msra.mxu0 %v301
    %v303 = vand.u32 %v147, 4294901760
    %304 = vmatmul.f32.gmra.mxu0 %v303
    %v305 = vpop.f32.mrf.mxu0
    %v306 = vadd.f32 %v283, %v305
    %307 = vdwg.mxu0
    %v309 = vsel %vm110, %v306, 0
    %311 = vmatpush.msra.mxu0 0.0
    %312 = vmatpush.msra.mxu0 0.0
    %313 = vmatpush.msra.mxu0 0.0
    %314 = vmatpush.msra.mxu0 0.0
    %315 = vmatpush.msra.mxu0 0.0
    %316 = vmatpush.msra.mxu0 0.0
    %317 = vmatpush.msra.mxu0 0.0
    %318 = vmatpush.msra.mxu0 0.0
    %319 = vmatpush.msra.mxu0 0.0
    %320 = vmatpush.msra.mxu0 0.0
    %321 = vmatpush.msra.mxu0 0.0
    %322 = vmatpush.msra.mxu0 0.0
    %323 = vmatpush.msra.mxu0 0.0
    %324 = vmatpush.msra.mxu0 0.0
    %v325 = vand.u32 %v141, 4294901760
    %326 = vmatpush.msra.mxu0 %v325
    %v327 = vand.u32 %v140, 4294901760
    %328 = vmatpush.msra.mxu0 %v327
    %v329 = vand.u32 %v309, 4294901760
    %v330 = vsub.f32 %v309, %v329
    %v331 = vand.u32 %v330, 4294901760
    %v332 = vsub.f32 %v330, %v331
    %v333 = vand.u32 %v332, 4294901760
    %334 = vmatmul.f32.gmra.mxu0 %v333
    %v335 = vpop.f32.mrf.mxu0
    %v336 = vadd.f32 0.0, %v335
    %337 = vdwg.mxu0
    %338 = vmatpush.msra.mxu0 0.0
    %339 = vmatpush.msra.mxu0 0.0
    %340 = vmatpush.msra.mxu0 0.0
    %341 = vmatpush.msra.mxu0 0.0
    %342 = vmatpush.msra.mxu0 0.0
    %343 = vmatpush.msra.mxu0 0.0
    %344 = vmatpush.msra.mxu0 0.0
    %345 = vmatpush.msra.mxu0 0.0
    %346 = vmatpush.msra.mxu0 0.0
    %347 = vmatpush.msra.mxu0 0.0
    %348 = vmatpush.msra.mxu0 0.0
    %349 = vmatpush.msra.mxu0 0.0
    %350 = vmatpush.msra.mxu0 0.0
    %351 = vmatpush.msra.mxu0 0.0
    %v352 = vand.u32 %v141, 4294901760
    %v353 = vsub.f32 %v141, %v352
    %v354 = vand.u32 %v353, 4294901760
    %v355 = vsub.f32 %v353, %v354
    %v356 = vand.u32 %v355, 4294901760
    %357 = vmatpush.msra.mxu0 %v356
    %v358 = vand.u32 %v140, 4294901760
    %v359 = vsub.f32 %v140, %v358
    %v360 = vand.u32 %v359, 4294901760
    %v361 = vsub.f32 %v359, %v360
    %v362 = vand.u32 %v361, 4294901760
    %363 = vmatpush.msra.mxu0 %v362
    %v364 = vand.u32 %v309, 4294901760
    %365 = vmatmul.f32.gmra.mxu0 %v364
    %v366 = vpop.f32.mrf.mxu0
    %v367 = vadd.f32 %v336, %v366
    %368 = vdwg.mxu0
    %369 = vmatpush.msra.mxu0 0.0
    %370 = vmatpush.msra.mxu0 0.0
    %371 = vmatpush.msra.mxu0 0.0
    %372 = vmatpush.msra.mxu0 0.0
    %373 = vmatpush.msra.mxu0 0.0
    %374 = vmatpush.msra.mxu0 0.0
    %375 = vmatpush.msra.mxu0 0.0
    %376 = vmatpush.msra.mxu0 0.0
    %377 = vmatpush.msra.mxu0 0.0
    %378 = vmatpush.msra.mxu0 0.0
    %379 = vmatpush.msra.mxu0 0.0
    %380 = vmatpush.msra.mxu0 0.0
    %381 = vmatpush.msra.mxu0 0.0
    %382 = vmatpush.msra.mxu0 0.0
    %v383 = vand.u32 %v141, 4294901760
    %v384 = vsub.f32 %v141, %v383
    %385 = vmatpush.msra.mxu0 %v384
    %v386 = vand.u32 %v140, 4294901760
    %v387 = vsub.f32 %v140, %v386
    %388 = vmatpush.msra.mxu0 %v387
    %v389 = vand.u32 %v309, 4294901760
    %v390 = vsub.f32 %v309, %v389
    %391 = vmatmul.f32.gmra.mxu0 %v390
    %v392 = vpop.f32.mrf.mxu0
    %v393 = vadd.f32 %v367, %v392
    %394 = vdwg.mxu0
    %395 = vmatpush.msra.mxu0 0.0
    %396 = vmatpush.msra.mxu0 0.0
    %397 = vmatpush.msra.mxu0 0.0
    %398 = vmatpush.msra.mxu0 0.0
    %399 = vmatpush.msra.mxu0 0.0
    %400 = vmatpush.msra.mxu0 0.0
    %401 = vmatpush.msra.mxu0 0.0
    %402 = vmatpush.msra.mxu0 0.0
    %403 = vmatpush.msra.mxu0 0.0
    %404 = vmatpush.msra.mxu0 0.0
    %405 = vmatpush.msra.mxu0 0.0
    %406 = vmatpush.msra.mxu0 0.0
    %407 = vmatpush.msra.mxu0 0.0
    %408 = vmatpush.msra.mxu0 0.0
    %v409 = vand.u32 %v141, 4294901760
    %410 = vmatpush.msra.mxu0 %v409
    %v411 = vand.u32 %v140, 4294901760
    %412 = vmatpush.msra.mxu0 %v411
    %v413 = vand.u32 %v309, 4294901760
    %v414 = vsub.f32 %v309, %v413
    %v415 = vand.u32 %v414, 4294901760
    %416 = vmatmul.f32.gmra.mxu0 %v415
    %v417 = vpop.f32.mrf.mxu0
    %v418 = vadd.f32 %v393, %v417
    %419 = vdwg.mxu0
    %420 = vmatpush.msra.mxu0 0.0
    %421 = vmatpush.msra.mxu0 0.0
    %422 = vmatpush.msra.mxu0 0.0
    %423 = vmatpush.msra.mxu0 0.0
    %424 = vmatpush.msra.mxu0 0.0
    %425 = vmatpush.msra.mxu0 0.0
    %426 = vmatpush.msra.mxu0 0.0
    %427 = vmatpush.msra.mxu0 0.0
    %428 = vmatpush.msra.mxu0 0.0
    %429 = vmatpush.msra.mxu0 0.0
    %430 = vmatpush.msra.mxu0 0.0
    %431 = vmatpush.msra.mxu0 0.0
    %432 = vmatpush.msra.mxu0 0.0
    %433 = vmatpush.msra.mxu0 0.0
    %v434 = vand.u32 %v141, 4294901760
    %v435 = vsub.f32 %v141, %v434
    %v436 = vand.u32 %v435, 4294901760
    %437 = vmatpush.msra.mxu0 %v436
    %v438 = vand.u32 %v140, 4294901760
    %v439 = vsub.f32 %v140, %v438
    %v440 = vand.u32 %v439, 4294901760
    %441 = vmatpush.msra.mxu0 %v440
    %v442 = vand.u32 %v309, 4294901760
    %443 = vmatmul.f32.gmra.mxu0 %v442
    %v444 = vpop.f32.mrf.mxu0
    %v445 = vadd.f32 %v418, %v444
    %446 = vdwg.mxu0
    %447 = vmatpush.msra.mxu0 0.0
    %448 = vmatpush.msra.mxu0 0.0
    %449 = vmatpush.msra.mxu0 0.0
    %450 = vmatpush.msra.mxu0 0.0
    %451 = vmatpush.msra.mxu0 0.0
    %452 = vmatpush.msra.mxu0 0.0
    %453 = vmatpush.msra.mxu0 0.0
    %454 = vmatpush.msra.mxu0 0.0
    %455 = vmatpush.msra.mxu0 0.0
    %456 = vmatpush.msra.mxu0 0.0
    %457 = vmatpush.msra.mxu0 0.0
    %458 = vmatpush.msra.mxu0 0.0
    %459 = vmatpush.msra.mxu0 0.0
    %460 = vmatpush.msra.mxu0 0.0
    %v461 = vand.u32 %v141, 4294901760
    %462 = vmatpush.msra.mxu0 %v461
    %v463 = vand.u32 %v140, 4294901760
    %464 = vmatpush.msra.mxu0 %v463
    %v465 = vand.u32 %v309, 4294901760
    %466 = vmatmul.f32.gmra.mxu0 %v465
    %v467 = vpop.f32.mrf.mxu0
    %v468 = vadd.f32 %v445, %v467
    %469 = vdwg.mxu0
    %vm470 = vcmask 31744
    %v472 = vsel %vm470, %v468, 0
    %vm474 = vcmask 1043456
    %v476 = vsel %vm474, %v142, 0
    %478 = vmatpush.msra.mxu0 0.0
    %479 = vmatpush.msra.mxu0 0.0
    %480 = vmatpush.msra.mxu0 0.0
    %481 = vmatpush.msra.mxu0 0.0
    %482 = vmatpush.msra.mxu0 0.0
    %483 = vmatpush.msra.mxu0 0.0
    %484 = vmatpush.msra.mxu0 0.0
    %485 = vmatpush.msra.mxu0 0.0
    %486 = vmatpush.msra.mxu0 0.0
    %487 = vmatpush.msra.mxu0 0.0
    %488 = vmatpush.msra.mxu0 0.0
    %489 = vmatpush.msra.mxu0 0.0
    %490 = vmatpush.msra.mxu0 0.0
    %491 = vmatpush.msra.mxu0 0.0
    %492 = vmatpush.msra.mxu0 0.0
    %v493 = vand.u32 %v476, 4294901760
    %494 = vmatpush.msra.mxu0 %v493
    %v495 = vand.u32 %v472, 4294901760
    %v496 = vsub.f32 %v472, %v495
    %v497 = vand.u32 %v496, 4294901760
    %v498 = vsub.f32 %v496, %v497
    %v499 = vand.u32 %v498, 4294901760
    %500 = vmatmul.f32.gmra.mxu0 %v499
    %v501 = vpop.f32.mrf.mxu0
    %v502 = vadd.f32 0.0, %v501
    %503 = vdwg.mxu0
    %504 = vmatpush.msra.mxu0 0.0
    %505 = vmatpush.msra.mxu0 0.0
    %506 = vmatpush.msra.mxu0 0.0
    %507 = vmatpush.msra.mxu0 0.0
    %508 = vmatpush.msra.mxu0 0.0
    %509 = vmatpush.msra.mxu0 0.0
    %510 = vmatpush.msra.mxu0 0.0
    %511 = vmatpush.msra.mxu0 0.0
    %512 = vmatpush.msra.mxu0 0.0
    %513 = vmatpush.msra.mxu0 0.0
    %514 = vmatpush.msra.mxu0 0.0
    %515 = vmatpush.msra.mxu0 0.0
    %516 = vmatpush.msra.mxu0 0.0
    %517 = vmatpush.msra.mxu0 0.0
    %518 = vmatpush.msra.mxu0 0.0
    %v519 = vand.u32 %v476, 4294901760
    %v520 = vsub.f32 %v476, %v519
    %v521 = vand.u32 %v520, 4294901760
    %v522 = vsub.f32 %v520, %v521
    %v523 = vand.u32 %v522, 4294901760
    %524 = vmatpush.msra.mxu0 %v523
    %v525 = vand.u32 %v472, 4294901760
    %526 = vmatmul.f32.gmra.mxu0 %v525
    %v527 = vpop.f32.mrf.mxu0
    %v528 = vadd.f32 %v502, %v527
    %529 = vdwg.mxu0
    %530 = vmatpush.msra.mxu0 0.0
    %531 = vmatpush.msra.mxu0 0.0
    %532 = vmatpush.msra.mxu0 0.0
    %533 = vmatpush.msra.mxu0 0.0
    %534 = vmatpush.msra.mxu0 0.0
    %535 = vmatpush.msra.mxu0 0.0
    %536 = vmatpush.msra.mxu0 0.0
    %537 = vmatpush.msra.mxu0 0.0
    %538 = vmatpush.msra.mxu0 0.0
    %539 = vmatpush.msra.mxu0 0.0
    %540 = vmatpush.msra.mxu0 0.0
    %541 = vmatpush.msra.mxu0 0.0
    %542 = vmatpush.msra.mxu0 0.0
    %543 = vmatpush.msra.mxu0 0.0
    %544 = vmatpush.msra.mxu0 0.0
    %v545 = vand.u32 %v476, 4294901760
    %v546 = vsub.f32 %v476, %v545
    %547 = vmatpush.msra.mxu0 %v546
    %v548 = vand.u32 %v472, 4294901760
    %v549 = vsub.f32 %v472, %v548
    %550 = vmatmul.f32.gmra.mxu0 %v549
    %v551 = vpop.f32.mrf.mxu0
    %v552 = vadd.f32 %v528, %v551
    %553 = vdwg.mxu0
    %554 = vmatpush.msra.mxu0 0.0
    %555 = vmatpush.msra.mxu0 0.0
    %556 = vmatpush.msra.mxu0 0.0
    %557 = vmatpush.msra.mxu0 0.0
    %558 = vmatpush.msra.mxu0 0.0
    %559 = vmatpush.msra.mxu0 0.0
    %560 = vmatpush.msra.mxu0 0.0
    %561 = vmatpush.msra.mxu0 0.0
    %562 = vmatpush.msra.mxu0 0.0
    %563 = vmatpush.msra.mxu0 0.0
    %564 = vmatpush.msra.mxu0 0.0
    %565 = vmatpush.msra.mxu0 0.0
    %566 = vmatpush.msra.mxu0 0.0
    %567 = vmatpush.msra.mxu0 0.0
    %568 = vmatpush.msra.mxu0 0.0
    %v569 = vand.u32 %v476, 4294901760
    %570 = vmatpush.msra.mxu0 %v569
    %v571 = vand.u32 %v472, 4294901760
    %v572 = vsub.f32 %v472, %v571
    %v573 = vand.u32 %v572, 4294901760
    %574 = vmatmul.f32.gmra.mxu0 %v573
    %v575 = vpop.f32.mrf.mxu0
    %v576 = vadd.f32 %v552, %v575
    %577 = vdwg.mxu0
    %578 = vmatpush.msra.mxu0 0.0
    %579 = vmatpush.msra.mxu0 0.0
    %580 = vmatpush.msra.mxu0 0.0
    %581 = vmatpush.msra.mxu0 0.0
    %582 = vmatpush.msra.mxu0 0.0
    %583 = vmatpush.msra.mxu0 0.0
    %584 = vmatpush.msra.mxu0 0.0
    %585 = vmatpush.msra.mxu0 0.0
    %586 = vmatpush.msra.mxu0 0.0
    %587 = vmatpush.msra.mxu0 0.0
    %588 = vmatpush.msra.mxu0 0.0
    %589 = vmatpush.msra.mxu0 0.0
    %590 = vmatpush.msra.mxu0 0.0
    %591 = vmatpush.msra.mxu0 0.0
    %592 = vmatpush.msra.mxu0 0.0
    %v593 = vand.u32 %v476, 4294901760
    %v594 = vsub.f32 %v476, %v593
    %v595 = vand.u32 %v594, 4294901760
    %596 = vmatpush.msra.mxu0 %v595
    %v597 = vand.u32 %v472, 4294901760
    %598 = vmatmul.f32.gmra.mxu0 %v597
    %v599 = vpop.f32.mrf.mxu0
    %v600 = vadd.f32 %v576, %v599
    %601 = vdwg.mxu0
    %602 = vmatpush.msra.mxu0 0.0
    %603 = vmatpush.msra.mxu0 0.0
    %604 = vmatpush.msra.mxu0 0.0
    %605 = vmatpush.msra.mxu0 0.0
    %606 = vmatpush.msra.mxu0 0.0
    %607 = vmatpush.msra.mxu0 0.0
    %608 = vmatpush.msra.mxu0 0.0
    %609 = vmatpush.msra.mxu0 0.0
    %610 = vmatpush.msra.mxu0 0.0
    %611 = vmatpush.msra.mxu0 0.0
    %612 = vmatpush.msra.mxu0 0.0
    %613 = vmatpush.msra.mxu0 0.0
    %614 = vmatpush.msra.mxu0 0.0
    %615 = vmatpush.msra.mxu0 0.0
    %616 = vmatpush.msra.mxu0 0.0
    %v617 = vand.u32 %v476, 4294901760
    %618 = vmatpush.msra.mxu0 %v617
    %v619 = vand.u32 %v472, 4294901760
    %620 = vmatmul.f32.gmra.mxu0 %v619
    %v621 = vpop.f32.mrf.mxu0
    %v622 = vadd.f32 %v600, %v621
    %623 = vdwg.mxu0
    %v625 = vsel %vm474, %v143, 0
    %627 = vmatpush.msra.mxu0 0.0
    %628 = vmatpush.msra.mxu0 0.0
    %629 = vmatpush.msra.mxu0 0.0
    %630 = vmatpush.msra.mxu0 0.0
    %631 = vmatpush.msra.mxu0 0.0
    %632 = vmatpush.msra.mxu0 0.0
    %633 = vmatpush.msra.mxu0 0.0
    %634 = vmatpush.msra.mxu0 0.0
    %635 = vmatpush.msra.mxu0 0.0
    %636 = vmatpush.msra.mxu0 0.0
    %637 = vmatpush.msra.mxu0 0.0
    %638 = vmatpush.msra.mxu0 0.0
    %639 = vmatpush.msra.mxu0 0.0
    %640 = vmatpush.msra.mxu0 0.0
    %641 = vmatpush.msra.mxu0 0.0
    %v642 = vand.u32 %v625, 4294901760
    %643 = vmatpush.msra.mxu0 %v642
    %v644 = vand.u32 %v472, 4294901760
    %v645 = vsub.f32 %v472, %v644
    %v646 = vand.u32 %v645, 4294901760
    %v647 = vsub.f32 %v645, %v646
    %v648 = vand.u32 %v647, 4294901760
    %649 = vmatmul.f32.gmra.mxu0 %v648
    %v650 = vpop.f32.mrf.mxu0
    %v651 = vadd.f32 0.0, %v650
    %652 = vdwg.mxu0
    %653 = vmatpush.msra.mxu0 0.0
    %654 = vmatpush.msra.mxu0 0.0
    %655 = vmatpush.msra.mxu0 0.0
    %656 = vmatpush.msra.mxu0 0.0
    %657 = vmatpush.msra.mxu0 0.0
    %658 = vmatpush.msra.mxu0 0.0
    %659 = vmatpush.msra.mxu0 0.0
    %660 = vmatpush.msra.mxu0 0.0
    %661 = vmatpush.msra.mxu0 0.0
    %662 = vmatpush.msra.mxu0 0.0
    %663 = vmatpush.msra.mxu0 0.0
    %664 = vmatpush.msra.mxu0 0.0
    %665 = vmatpush.msra.mxu0 0.0
    %666 = vmatpush.msra.mxu0 0.0
    %667 = vmatpush.msra.mxu0 0.0
    %v668 = vand.u32 %v625, 4294901760
    %v669 = vsub.f32 %v625, %v668
    %v670 = vand.u32 %v669, 4294901760
    %v671 = vsub.f32 %v669, %v670
    %v672 = vand.u32 %v671, 4294901760
    %673 = vmatpush.msra.mxu0 %v672
    %v674 = vand.u32 %v472, 4294901760
    %675 = vmatmul.f32.gmra.mxu0 %v674
    %v676 = vpop.f32.mrf.mxu0
    %v677 = vadd.f32 %v651, %v676
    %678 = vdwg.mxu0
    %679 = vmatpush.msra.mxu0 0.0
    %680 = vmatpush.msra.mxu0 0.0
    %681 = vmatpush.msra.mxu0 0.0
    %682 = vmatpush.msra.mxu0 0.0
    %683 = vmatpush.msra.mxu0 0.0
    %684 = vmatpush.msra.mxu0 0.0
    %685 = vmatpush.msra.mxu0 0.0
    %686 = vmatpush.msra.mxu0 0.0
    %687 = vmatpush.msra.mxu0 0.0
    %688 = vmatpush.msra.mxu0 0.0
    %689 = vmatpush.msra.mxu0 0.0
    %690 = vmatpush.msra.mxu0 0.0
    %691 = vmatpush.msra.mxu0 0.0
    %692 = vmatpush.msra.mxu0 0.0
    %693 = vmatpush.msra.mxu0 0.0
    %v694 = vand.u32 %v625, 4294901760
    %v695 = vsub.f32 %v625, %v694
    %696 = vmatpush.msra.mxu0 %v695
    %v697 = vand.u32 %v472, 4294901760
    %v698 = vsub.f32 %v472, %v697
    %699 = vmatmul.f32.gmra.mxu0 %v698
    %v700 = vpop.f32.mrf.mxu0
    %v701 = vadd.f32 %v677, %v700
    %702 = vdwg.mxu0
    %703 = vmatpush.msra.mxu0 0.0
    %704 = vmatpush.msra.mxu0 0.0
    %705 = vmatpush.msra.mxu0 0.0
    %706 = vmatpush.msra.mxu0 0.0
    %707 = vmatpush.msra.mxu0 0.0
    %708 = vmatpush.msra.mxu0 0.0
    %709 = vmatpush.msra.mxu0 0.0
    %710 = vmatpush.msra.mxu0 0.0
    %711 = vmatpush.msra.mxu0 0.0
    %712 = vmatpush.msra.mxu0 0.0
    %713 = vmatpush.msra.mxu0 0.0
    %714 = vmatpush.msra.mxu0 0.0
    %715 = vmatpush.msra.mxu0 0.0
    %716 = vmatpush.msra.mxu0 0.0
    %717 = vmatpush.msra.mxu0 0.0
    %v718 = vand.u32 %v625, 4294901760
    %719 = vmatpush.msra.mxu0 %v718
    %v720 = vand.u32 %v472, 4294901760
    %v721 = vsub.f32 %v472, %v720
    %v722 = vand.u32 %v721, 4294901760
    %723 = vmatmul.f32.gmra.mxu0 %v722
    %v724 = vpop.f32.mrf.mxu0
    %v725 = vadd.f32 %v701, %v724
    %726 = vdwg.mxu0
    %727 = vmatpush.msra.mxu0 0.0
    %728 = vmatpush.msra.mxu0 0.0
    %729 = vmatpush.msra.mxu0 0.0
    %730 = vmatpush.msra.mxu0 0.0
    %731 = vmatpush.msra.mxu0 0.0
    %732 = vmatpush.msra.mxu0 0.0
    %733 = vmatpush.msra.mxu0 0.0
    %734 = vmatpush.msra.mxu0 0.0
    %735 = vmatpush.msra.mxu0 0.0
    %736 = vmatpush.msra.mxu0 0.0
    %737 = vmatpush.msra.mxu0 0.0
    %738 = vmatpush.msra.mxu0 0.0
    %739 = vmatpush.msra.mxu0 0.0
    %740 = vmatpush.msra.mxu0 0.0
    %741 = vmatpush.msra.mxu0 0.0
    %v742 = vand.u32 %v625, 4294901760
    %v743 = vsub.f32 %v625, %v742
    %v744 = vand.u32 %v743, 4294901760
    %745 = vmatpush.msra.mxu0 %v744
    %v746 = vand.u32 %v472, 4294901760
    %747 = vmatmul.f32.gmra.mxu0 %v746
    %v748 = vpop.f32.mrf.mxu0
    %v749 = vadd.f32 %v725, %v748
    %750 = vdwg.mxu0
    %751 = vmatpush.msra.mxu0 0.0
    %752 = vmatpush.msra.mxu0 0.0
    %753 = vmatpush.msra.mxu0 0.0
    %754 = vmatpush.msra.mxu0 0.0
    %755 = vmatpush.msra.mxu0 0.0
    %756 = vmatpush.msra.mxu0 0.0
    %757 = vmatpush.msra.mxu0 0.0
    %758 = vmatpush.msra.mxu0 0.0
    %759 = vmatpush.msra.mxu0 0.0
    %760 = vmatpush.msra.mxu0 0.0
    %761 = vmatpush.msra.mxu0 0.0
    %762 = vmatpush.msra.mxu0 0.0
    %763 = vmatpush.msra.mxu0 0.0
    %764 = vmatpush.msra.mxu0 0.0
    %765 = vmatpush.msra.mxu0 0.0
    %v766 = vand.u32 %v625, 4294901760
    %767 = vmatpush.msra.mxu0 %v766
    %v768 = vand.u32 %v472, 4294901760
    %769 = vmatmul.f32.gmra.mxu0 %v768
    %v770 = vpop.f32.mrf.mxu0
    %v771 = vadd.f32 %v749, %v770
    %772 = vdwg.mxu0
    %v774 = vsel %vm470, %v144, 0
    %v776 = vsel %vm474, %v468, 0
    %778 = vmatpush.msra.mxu0 0.0
    %779 = vmatpush.msra.mxu0 0.0
    %780 = vmatpush.msra.mxu0 0.0
    %781 = vmatpush.msra.mxu0 0.0
    %782 = vmatpush.msra.mxu0 0.0
    %783 = vmatpush.msra.mxu0 0.0
    %784 = vmatpush.msra.mxu0 0.0
    %785 = vmatpush.msra.mxu0 0.0
    %786 = vmatpush.msra.mxu0 0.0
    %787 = vmatpush.msra.mxu0 0.0
    %788 = vmatpush.msra.mxu0 0.0
    %789 = vmatpush.msra.mxu0 0.0
    %790 = vmatpush.msra.mxu0 0.0
    %791 = vmatpush.msra.mxu0 0.0
    %792 = vmatpush.msra.mxu0 0.0
    %v793 = vand.u32 %v776, 4294901760
    %794 = vmatpush.msra.mxu0 %v793
    %v795 = vand.u32 %v774, 4294901760
    %v796 = vsub.f32 %v774, %v795
    %v797 = vand.u32 %v796, 4294901760
    %v798 = vsub.f32 %v796, %v797
    %v799 = vand.u32 %v798, 4294901760
    %800 = vmatmul.f32.gmra.mxu0 %v799
    %v801 = vpop.f32.mrf.mxu0
    %v802 = vadd.f32 0.0, %v801
    %803 = vdwg.mxu0
    %804 = vmatpush.msra.mxu0 0.0
    %805 = vmatpush.msra.mxu0 0.0
    %806 = vmatpush.msra.mxu0 0.0
    %807 = vmatpush.msra.mxu0 0.0
    %808 = vmatpush.msra.mxu0 0.0
    %809 = vmatpush.msra.mxu0 0.0
    %810 = vmatpush.msra.mxu0 0.0
    %811 = vmatpush.msra.mxu0 0.0
    %812 = vmatpush.msra.mxu0 0.0
    %813 = vmatpush.msra.mxu0 0.0
    %814 = vmatpush.msra.mxu0 0.0
    %815 = vmatpush.msra.mxu0 0.0
    %816 = vmatpush.msra.mxu0 0.0
    %817 = vmatpush.msra.mxu0 0.0
    %818 = vmatpush.msra.mxu0 0.0
    %v819 = vand.u32 %v776, 4294901760
    %v820 = vsub.f32 %v776, %v819
    %v821 = vand.u32 %v820, 4294901760
    %v822 = vsub.f32 %v820, %v821
    %v823 = vand.u32 %v822, 4294901760
    %824 = vmatpush.msra.mxu0 %v823
    %v825 = vand.u32 %v774, 4294901760
    %826 = vmatmul.f32.gmra.mxu0 %v825
    %v827 = vpop.f32.mrf.mxu0
    %v828 = vadd.f32 %v802, %v827
    %829 = vdwg.mxu0
    %830 = vmatpush.msra.mxu0 0.0
    %831 = vmatpush.msra.mxu0 0.0
    %832 = vmatpush.msra.mxu0 0.0
    %833 = vmatpush.msra.mxu0 0.0
    %834 = vmatpush.msra.mxu0 0.0
    %835 = vmatpush.msra.mxu0 0.0
    %836 = vmatpush.msra.mxu0 0.0
    %837 = vmatpush.msra.mxu0 0.0
    %838 = vmatpush.msra.mxu0 0.0
    %839 = vmatpush.msra.mxu0 0.0
    %840 = vmatpush.msra.mxu0 0.0
    %841 = vmatpush.msra.mxu0 0.0
    %842 = vmatpush.msra.mxu0 0.0
    %843 = vmatpush.msra.mxu0 0.0
    %844 = vmatpush.msra.mxu0 0.0
    %v845 = vand.u32 %v776, 4294901760
    %v846 = vsub.f32 %v776, %v845
    %847 = vmatpush.msra.mxu0 %v846
    %v848 = vand.u32 %v774, 4294901760
    %v849 = vsub.f32 %v774, %v848
    %850 = vmatmul.f32.gmra.mxu0 %v849
    %v851 = vpop.f32.mrf.mxu0
    %v852 = vadd.f32 %v828, %v851
    %853 = vdwg.mxu0
    %854 = vmatpush.msra.mxu0 0.0
    %855 = vmatpush.msra.mxu0 0.0
    %856 = vmatpush.msra.mxu0 0.0
    %857 = vmatpush.msra.mxu0 0.0
    %858 = vmatpush.msra.mxu0 0.0
    %859 = vmatpush.msra.mxu0 0.0
    %860 = vmatpush.msra.mxu0 0.0
    %861 = vmatpush.msra.mxu0 0.0
    %862 = vmatpush.msra.mxu0 0.0
    %863 = vmatpush.msra.mxu0 0.0
    %864 = vmatpush.msra.mxu0 0.0
    %865 = vmatpush.msra.mxu0 0.0
    %866 = vmatpush.msra.mxu0 0.0
    %867 = vmatpush.msra.mxu0 0.0
    %868 = vmatpush.msra.mxu0 0.0
    %v869 = vand.u32 %v776, 4294901760
    %870 = vmatpush.msra.mxu0 %v869
    %v871 = vand.u32 %v774, 4294901760
    %v872 = vsub.f32 %v774, %v871
    %v873 = vand.u32 %v872, 4294901760
    %874 = vmatmul.f32.gmra.mxu0 %v873
    %v875 = vpop.f32.mrf.mxu0
    %v876 = vadd.f32 %v852, %v875
    %877 = vdwg.mxu0
    %878 = vmatpush.msra.mxu0 0.0
    %879 = vmatpush.msra.mxu0 0.0
    %880 = vmatpush.msra.mxu0 0.0
    %881 = vmatpush.msra.mxu0 0.0
    %882 = vmatpush.msra.mxu0 0.0
    %883 = vmatpush.msra.mxu0 0.0
    %884 = vmatpush.msra.mxu0 0.0
    %885 = vmatpush.msra.mxu0 0.0
    %886 = vmatpush.msra.mxu0 0.0
    %887 = vmatpush.msra.mxu0 0.0
    %888 = vmatpush.msra.mxu0 0.0
    %889 = vmatpush.msra.mxu0 0.0
    %890 = vmatpush.msra.mxu0 0.0
    %891 = vmatpush.msra.mxu0 0.0
    %892 = vmatpush.msra.mxu0 0.0
    %v893 = vand.u32 %v776, 4294901760
    %v894 = vsub.f32 %v776, %v893
    %v895 = vand.u32 %v894, 4294901760
    %896 = vmatpush.msra.mxu0 %v895
    %v897 = vand.u32 %v774, 4294901760
    %898 = vmatmul.f32.gmra.mxu0 %v897
    %v899 = vpop.f32.mrf.mxu0
    %v900 = vadd.f32 %v876, %v899
    %901 = vdwg.mxu0
    %902 = vmatpush.msra.mxu0 0.0
    %903 = vmatpush.msra.mxu0 0.0
    %904 = vmatpush.msra.mxu0 0.0
    %905 = vmatpush.msra.mxu0 0.0
    %906 = vmatpush.msra.mxu0 0.0
    %907 = vmatpush.msra.mxu0 0.0
    %908 = vmatpush.msra.mxu0 0.0
    %909 = vmatpush.msra.mxu0 0.0
    %910 = vmatpush.msra.mxu0 0.0
    %911 = vmatpush.msra.mxu0 0.0
    %912 = vmatpush.msra.mxu0 0.0
    %913 = vmatpush.msra.mxu0 0.0
    %914 = vmatpush.msra.mxu0 0.0
    %915 = vmatpush.msra.mxu0 0.0
    %916 = vmatpush.msra.mxu0 0.0
    %v917 = vand.u32 %v776, 4294901760
    %918 = vmatpush.msra.mxu0 %v917
    %v919 = vand.u32 %v774, 4294901760
    %920 = vmatmul.f32.gmra.mxu0 %v919
    %v921 = vpop.f32.mrf.mxu0
    %v922 = vadd.f32 %v900, %v921
    %923 = vdwg.mxu0
    %v925 = vsel %vm470, %v145, 0
    %927 = vmatpush.msra.mxu0 0.0
    %928 = vmatpush.msra.mxu0 0.0
    %929 = vmatpush.msra.mxu0 0.0
    %930 = vmatpush.msra.mxu0 0.0
    %931 = vmatpush.msra.mxu0 0.0
    %932 = vmatpush.msra.mxu0 0.0
    %933 = vmatpush.msra.mxu0 0.0
    %934 = vmatpush.msra.mxu0 0.0
    %935 = vmatpush.msra.mxu0 0.0
    %936 = vmatpush.msra.mxu0 0.0
    %937 = vmatpush.msra.mxu0 0.0
    %938 = vmatpush.msra.mxu0 0.0
    %939 = vmatpush.msra.mxu0 0.0
    %940 = vmatpush.msra.mxu0 0.0
    %941 = vmatpush.msra.mxu0 0.0
    %v942 = vand.u32 %v776, 4294901760
    %943 = vmatpush.msra.mxu0 %v942
    %v944 = vand.u32 %v925, 4294901760
    %v945 = vsub.f32 %v925, %v944
    %v946 = vand.u32 %v945, 4294901760
    %v947 = vsub.f32 %v945, %v946
    %v948 = vand.u32 %v947, 4294901760
    %949 = vmatmul.f32.gmra.mxu0 %v948
    %v950 = vpop.f32.mrf.mxu0
    %v951 = vadd.f32 0.0, %v950
    %952 = vdwg.mxu0
    %953 = vmatpush.msra.mxu0 0.0
    %954 = vmatpush.msra.mxu0 0.0
    %955 = vmatpush.msra.mxu0 0.0
    %956 = vmatpush.msra.mxu0 0.0
    %957 = vmatpush.msra.mxu0 0.0
    %958 = vmatpush.msra.mxu0 0.0
    %959 = vmatpush.msra.mxu0 0.0
    %960 = vmatpush.msra.mxu0 0.0
    %961 = vmatpush.msra.mxu0 0.0
    %962 = vmatpush.msra.mxu0 0.0
    %963 = vmatpush.msra.mxu0 0.0
    %964 = vmatpush.msra.mxu0 0.0
    %965 = vmatpush.msra.mxu0 0.0
    %966 = vmatpush.msra.mxu0 0.0
    %967 = vmatpush.msra.mxu0 0.0
    %v968 = vand.u32 %v776, 4294901760
    %v969 = vsub.f32 %v776, %v968
    %v970 = vand.u32 %v969, 4294901760
    %v971 = vsub.f32 %v969, %v970
    %v972 = vand.u32 %v971, 4294901760
    %973 = vmatpush.msra.mxu0 %v972
    %v974 = vand.u32 %v925, 4294901760
    %975 = vmatmul.f32.gmra.mxu0 %v974
    %v976 = vpop.f32.mrf.mxu0
    %v977 = vadd.f32 %v951, %v976
    %978 = vdwg.mxu0
    %979 = vmatpush.msra.mxu0 0.0
    %980 = vmatpush.msra.mxu0 0.0
    %981 = vmatpush.msra.mxu0 0.0
    %982 = vmatpush.msra.mxu0 0.0
    %983 = vmatpush.msra.mxu0 0.0
    %984 = vmatpush.msra.mxu0 0.0
    %985 = vmatpush.msra.mxu0 0.0
    %986 = vmatpush.msra.mxu0 0.0
    %987 = vmatpush.msra.mxu0 0.0
    %988 = vmatpush.msra.mxu0 0.0
    %989 = vmatpush.msra.mxu0 0.0
    %990 = vmatpush.msra.mxu0 0.0
    %991 = vmatpush.msra.mxu0 0.0
    %992 = vmatpush.msra.mxu0 0.0
    %993 = vmatpush.msra.mxu0 0.0
    %v994 = vand.u32 %v776, 4294901760
    %v995 = vsub.f32 %v776, %v994
    %996 = vmatpush.msra.mxu0 %v995
    %v997 = vand.u32 %v925, 4294901760
    %v998 = vsub.f32 %v925, %v997
    %999 = vmatmul.f32.gmra.mxu0 %v998
    %v1000 = vpop.f32.mrf.mxu0
    %v1001 = vadd.f32 %v977, %v1000
    %1002 = vdwg.mxu0
    %1003 = vmatpush.msra.mxu0 0.0
    %1004 = vmatpush.msra.mxu0 0.0
    %1005 = vmatpush.msra.mxu0 0.0
    %1006 = vmatpush.msra.mxu0 0.0
    %1007 = vmatpush.msra.mxu0 0.0
    %1008 = vmatpush.msra.mxu0 0.0
    %1009 = vmatpush.msra.mxu0 0.0
    %1010 = vmatpush.msra.mxu0 0.0
    %1011 = vmatpush.msra.mxu0 0.0
    %1012 = vmatpush.msra.mxu0 0.0
    %1013 = vmatpush.msra.mxu0 0.0
    %1014 = vmatpush.msra.mxu0 0.0
    %1015 = vmatpush.msra.mxu0 0.0
    %1016 = vmatpush.msra.mxu0 0.0
    %1017 = vmatpush.msra.mxu0 0.0
    %v1018 = vand.u32 %v776, 4294901760
    %1019 = vmatpush.msra.mxu0 %v1018
    %v1020 = vand.u32 %v925, 4294901760
    %v1021 = vsub.f32 %v925, %v1020
    %v1022 = vand.u32 %v1021, 4294901760
    %1023 = vmatmul.f32.gmra.mxu0 %v1022
    %v1024 = vpop.f32.mrf.mxu0
    %v1025 = vadd.f32 %v1001, %v1024
    %1026 = vdwg.mxu0
    %1027 = vmatpush.msra.mxu0 0.0
    %1028 = vmatpush.msra.mxu0 0.0
    %1029 = vmatpush.msra.mxu0 0.0
    %1030 = vmatpush.msra.mxu0 0.0
    %1031 = vmatpush.msra.mxu0 0.0
    %1032 = vmatpush.msra.mxu0 0.0
    %1033 = vmatpush.msra.mxu0 0.0
    %1034 = vmatpush.msra.mxu0 0.0
    %1035 = vmatpush.msra.mxu0 0.0
    %1036 = vmatpush.msra.mxu0 0.0
    %1037 = vmatpush.msra.mxu0 0.0
    %1038 = vmatpush.msra.mxu0 0.0
    %1039 = vmatpush.msra.mxu0 0.0
    %1040 = vmatpush.msra.mxu0 0.0
    %1041 = vmatpush.msra.mxu0 0.0
    %v1042 = vand.u32 %v776, 4294901760
    %v1043 = vsub.f32 %v776, %v1042
    %v1044 = vand.u32 %v1043, 4294901760
    %1045 = vmatpush.msra.mxu0 %v1044
    %v1046 = vand.u32 %v925, 4294901760
    %1047 = vmatmul.f32.gmra.mxu0 %v1046
    %v1048 = vpop.f32.mrf.mxu0
    %v1049 = vadd.f32 %v1025, %v1048
    %1050 = vdwg.mxu0
    %1051 = vmatpush.msra.mxu0 0.0
    %1052 = vmatpush.msra.mxu0 0.0
    %1053 = vmatpush.msra.mxu0 0.0
    %1054 = vmatpush.msra.mxu0 0.0
    %1055 = vmatpush.msra.mxu0 0.0
    %1056 = vmatpush.msra.mxu0 0.0
    %1057 = vmatpush.msra.mxu0 0.0
    %1058 = vmatpush.msra.mxu0 0.0
    %1059 = vmatpush.msra.mxu0 0.0
    %1060 = vmatpush.msra.mxu0 0.0
    %1061 = vmatpush.msra.mxu0 0.0
    %1062 = vmatpush.msra.mxu0 0.0
    %1063 = vmatpush.msra.mxu0 0.0
    %1064 = vmatpush.msra.mxu0 0.0
    %1065 = vmatpush.msra.mxu0 0.0
    %v1066 = vand.u32 %v776, 4294901760
    %1067 = vmatpush.msra.mxu0 %v1066
    %v1068 = vand.u32 %v925, 4294901760
    %1069 = vmatmul.f32.gmra.mxu0 %v1068
    %v1070 = vpop.f32.mrf.mxu0
    %v1071 = vadd.f32 %v1049, %v1070
    %1072 = vdwg.mxu0
    %v1073 = vmul.f32 %v622, %v622
    %v1074 = vmul.f32 %v771, %v771
    %v1075 = vadd.f32 %v1073, %v1074
    %v1076 = vmul.f32 %v922, %v922
    %v1077 = vadd.f32 %v1075, %v1076
    %v1078 = vmul.f32 %v1071, %v1071
    %v1079 = vadd.f32 %v1077, %v1078
    %vm1080 = vcmask 27648
    %1081 = vst.msk [vmem:[#allocation7] sm:$0xf] %vm1080, %v1079
    %1082 = vmatpush.msra.mxu0 0.0
    %1083 = vmatpush.msra.mxu0 0.0
    %1084 = vmatpush.msra.mxu0 0.0
    %1085 = vmatpush.msra.mxu0 0.0
    %1086 = vmatpush.msra.mxu0 0.0
    %1087 = vmatpush.msra.mxu0 0.0
    %1088 = vmatpush.msra.mxu0 0.0
    %1089 = vmatpush.msra.mxu0 0.0
    %1090 = vmatpush.msra.mxu0 0.0
    %1091 = vmatpush.msra.mxu0 0.0
    %1092 = vmatpush.msra.mxu0 0.0
    %1093 = vmatpush.msra.mxu0 0.0
    %1094 = vmatpush.msra.mxu0 0.0
    %1095 = vmatpush.msra.mxu0 0.0
    %v1096 = vand.u32 %v138, 4294901760
    %1097 = vmatpush.msra.mxu0 %v1096
    %v1098 = vand.u32 %v131, 4294901760
    %1099 = vmatpush.msra.mxu0 %v1098
    %v1100 = vand.u32 %v147, 4294901760
    %v1101 = vsub.f32 %v147, %v1100
    %v1102 = vand.u32 %v1101, 4294901760
    %v1103 = vsub.f32 %v1101, %v1102
    %v1104 = vand.u32 %v1103, 4294901760
    %1105 = vmatmul.f32.gmra.mxu0 %v1104
    %v1106 = vpop.f32.mrf.mxu0
    %v1107 = vadd.f32 0.0, %v1106
    %1108 = vdwg.mxu0
    %1109 = vmatpush.msra.mxu0 0.0
    %1110 = vmatpush.msra.mxu0 0.0
    %1111 = vmatpush.msra.mxu0 0.0
    %1112 = vmatpush.msra.mxu0 0.0
    %1113 = vmatpush.msra.mxu0 0.0
    %1114 = vmatpush.msra.mxu0 0.0
    %1115 = vmatpush.msra.mxu0 0.0
    %1116 = vmatpush.msra.mxu0 0.0
    %1117 = vmatpush.msra.mxu0 0.0
    %1118 = vmatpush.msra.mxu0 0.0
    %1119 = vmatpush.msra.mxu0 0.0
    %1120 = vmatpush.msra.mxu0 0.0
    %1121 = vmatpush.msra.mxu0 0.0
    %1122 = vmatpush.msra.mxu0 0.0
    %v1123 = vand.u32 %v138, 4294901760
    %v1124 = vsub.f32 %v138, %v1123
    %v1125 = vand.u32 %v1124, 4294901760
    %v1126 = vsub.f32 %v1124, %v1125
    %v1127 = vand.u32 %v1126, 4294901760
    %1128 = vmatpush.msra.mxu0 %v1127
    %v1129 = vand.u32 %v131, 4294901760
    %v1130 = vsub.f32 %v131, %v1129
    %v1131 = vand.u32 %v1130, 4294901760
    %v1132 = vsub.f32 %v1130, %v1131
    %v1133 = vand.u32 %v1132, 4294901760
    %1134 = vmatpush.msra.mxu0 %v1133
    %v1135 = vand.u32 %v147, 4294901760
    %1136 = vmatmul.f32.gmra.mxu0 %v1135
    %v1137 = vpop.f32.mrf.mxu0
    %v1138 = vadd.f32 %v1107, %v1137
    %1139 = vdwg.mxu0
    %1140 = vmatpush.msra.mxu0 0.0
    %1141 = vmatpush.msra.mxu0 0.0
    %1142 = vmatpush.msra.mxu0 0.0
    %1143 = vmatpush.msra.mxu0 0.0
    %1144 = vmatpush.msra.mxu0 0.0
    %1145 = vmatpush.msra.mxu0 0.0
    %1146 = vmatpush.msra.mxu0 0.0
    %1147 = vmatpush.msra.mxu0 0.0
    %1148 = vmatpush.msra.mxu0 0.0
    %1149 = vmatpush.msra.mxu0 0.0
    %1150 = vmatpush.msra.mxu0 0.0
    %1151 = vmatpush.msra.mxu0 0.0
    %1152 = vmatpush.msra.mxu0 0.0
    %1153 = vmatpush.msra.mxu0 0.0
    %v1154 = vand.u32 %v138, 4294901760
    %v1155 = vsub.f32 %v138, %v1154
    %1156 = vmatpush.msra.mxu0 %v1155
    %v1157 = vand.u32 %v131, 4294901760
    %v1158 = vsub.f32 %v131, %v1157
    %1159 = vmatpush.msra.mxu0 %v1158
    %v1160 = vand.u32 %v147, 4294901760
    %v1161 = vsub.f32 %v147, %v1160
    %1162 = vmatmul.f32.gmra.mxu0 %v1161
    %v1163 = vpop.f32.mrf.mxu0
    %v1164 = vadd.f32 %v1138, %v1163
    %1165 = vdwg.mxu0
    %1166 = vmatpush.msra.mxu0 0.0
    %1167 = vmatpush.msra.mxu0 0.0
    %1168 = vmatpush.msra.mxu0 0.0
    %1169 = vmatpush.msra.mxu0 0.0
    %1170 = vmatpush.msra.mxu0 0.0
    %1171 = vmatpush.msra.mxu0 0.0
    %1172 = vmatpush.msra.mxu0 0.0
    %1173 = vmatpush.msra.mxu0 0.0
    %1174 = vmatpush.msra.mxu0 0.0
    %1175 = vmatpush.msra.mxu0 0.0
    %1176 = vmatpush.msra.mxu0 0.0
    %1177 = vmatpush.msra.mxu0 0.0
    %1178 = vmatpush.msra.mxu0 0.0
    %1179 = vmatpush.msra.mxu0 0.0
    %v1180 = vand.u32 %v138, 4294901760
    %1181 = vmatpush.msra.mxu0 %v1180
    %v1182 = vand.u32 %v131, 4294901760
    %1183 = vmatpush.msra.mxu0 %v1182
    %v1184 = vand.u32 %v147, 4294901760
    %v1185 = vsub.f32 %v147, %v1184
    %v1186 = vand.u32 %v1185, 4294901760
    %1187 = vmatmul.f32.gmra.mxu0 %v1186
    %v1188 = vpop.f32.mrf.mxu0
    %v1189 = vadd.f32 %v1164, %v1188
    %1190 = vdwg.mxu0
    %1191 = vmatpush.msra.mxu0 0.0
    %1192 = vmatpush.msra.mxu0 0.0
    %1193 = vmatpush.msra.mxu0 0.0
    %1194 = vmatpush.msra.mxu0 0.0
    %1195 = vmatpush.msra.mxu0 0.0
    %1196 = vmatpush.msra.mxu0 0.0
    %1197 = vmatpush.msra.mxu0 0.0
    %1198 = vmatpush.msra.mxu0 0.0
    %1199 = vmatpush.msra.mxu0 0.0
    %1200 = vmatpush.msra.mxu0 0.0
    %1201 = vmatpush.msra.mxu0 0.0
    %1202 = vmatpush.msra.mxu0 0.0
    %1203 = vmatpush.msra.mxu0 0.0
    %1204 = vmatpush.msra.mxu0 0.0
    %v1205 = vand.u32 %v138, 4294901760
    %v1206 = vsub.f32 %v138, %v1205
    %v1207 = vand.u32 %v1206, 4294901760
    %1208 = vmatpush.msra.mxu0 %v1207
    %v1209 = vand.u32 %v131, 4294901760
    %v1210 = vsub.f32 %v131, %v1209
    %v1211 = vand.u32 %v1210, 4294901760
    %1212 = vmatpush.msra.mxu0 %v1211
    %v1213 = vand.u32 %v147, 4294901760
    %1214 = vmatmul.f32.gmra.mxu0 %v1213
    %v1215 = vpop.f32.mrf.mxu0
    %v1216 = vadd.f32 %v1189, %v1215
    %1217 = vdwg.mxu0
    %1218 = vmatpush.msra.mxu0 0.0
    %1219 = vmatpush.msra.mxu0 0.0
    %1220 = vmatpush.msra.mxu0 0.0
    %1221 = vmatpush.msra.mxu0 0.0
    %1222 = vmatpush.msra.mxu0 0.0
    %1223 = vmatpush.msra.mxu0 0.0
    %1224 = vmatpush.msra.mxu0 0.0
    %1225 = vmatpush.msra.mxu0 0.0
    %1226 = vmatpush.msra.mxu0 0.0
    %1227 = vmatpush.msra.mxu0 0.0
    %1228 = vmatpush.msra.mxu0 0.0
    %1229 = vmatpush.msra.mxu0 0.0
    %1230 = vmatpush.msra.mxu0 0.0
    %1231 = vmatpush.msra.mxu0 0.0
    %v1232 = vand.u32 %v138, 4294901760
    %1233 = vmatpush.msra.mxu0 %v1232
    %v1234 = vand.u32 %v131, 4294901760
    %1235 = vmatpush.msra.mxu0 %v1234
    %v1236 = vand.u32 %v147, 4294901760
    %1237 = vmatmul.f32.gmra.mxu0 %v1236
    %v1238 = vpop.f32.mrf.mxu0
    %v1239 = vadd.f32 %v1216, %v1238
    %1240 = vdwg.mxu0
    %v1242 = vsel %vm110, %v1239, 0
    %1244 = vmatpush.msra.mxu0 0.0
    %1245 = vmatpush.msra.mxu0 0.0
    %1246 = vmatpush.msra.mxu0 0.0
    %1247 = vmatpush.msra.mxu0 0.0
    %1248 = vmatpush.msra.mxu0 0.0
    %1249 = vmatpush.msra.mxu0 0.0
    %1250 = vmatpush.msra.mxu0 0.0
    %1251 = vmatpush.msra.mxu0 0.0
    %1252 = vmatpush.msra.mxu0 0.0
    %1253 = vmatpush.msra.mxu0 0.0
    %1254 = vmatpush.msra.mxu0 0.0
    %1255 = vmatpush.msra.mxu0 0.0
    %1256 = vmatpush.msra.mxu0 0.0
    %1257 = vmatpush.msra.mxu0 0.0
    %v1258 = vand.u32 %v141, 4294901760
    %1259 = vmatpush.msra.mxu0 %v1258
    %v1260 = vand.u32 %v140, 4294901760
    %1261 = vmatpush.msra.mxu0 %v1260
    %v1262 = vand.u32 %v1242, 4294901760
    %v1263 = vsub.f32 %v1242, %v1262
    %v1264 = vand.u32 %v1263, 4294901760
    %v1265 = vsub.f32 %v1263, %v1264
    %v1266 = vand.u32 %v1265, 4294901760
    %1267 = vmatmul.f32.gmra.mxu0 %v1266
    %v1268 = vpop.f32.mrf.mxu0
    %v1269 = vadd.f32 0.0, %v1268
    %1270 = vdwg.mxu0
    %1271 = vmatpush.msra.mxu0 0.0
    %1272 = vmatpush.msra.mxu0 0.0
    %1273 = vmatpush.msra.mxu0 0.0
    %1274 = vmatpush.msra.mxu0 0.0
    %1275 = vmatpush.msra.mxu0 0.0
    %1276 = vmatpush.msra.mxu0 0.0
    %1277 = vmatpush.msra.mxu0 0.0
    %1278 = vmatpush.msra.mxu0 0.0
    %1279 = vmatpush.msra.mxu0 0.0
    %1280 = vmatpush.msra.mxu0 0.0
    %1281 = vmatpush.msra.mxu0 0.0
    %1282 = vmatpush.msra.mxu0 0.0
    %1283 = vmatpush.msra.mxu0 0.0
    %1284 = vmatpush.msra.mxu0 0.0
    %v1285 = vand.u32 %v141, 4294901760
    %v1286 = vsub.f32 %v141, %v1285
    %v1287 = vand.u32 %v1286, 4294901760
    %v1288 = vsub.f32 %v1286, %v1287
    %v1289 = vand.u32 %v1288, 4294901760
    %1290 = vmatpush.msra.mxu0 %v1289
    %v1291 = vand.u32 %v140, 4294901760
    %v1292 = vsub.f32 %v140, %v1291
    %v1293 = vand.u32 %v1292, 4294901760
    %v1294 = vsub.f32 %v1292, %v1293
    %v1295 = vand.u32 %v1294, 4294901760
    %1296 = vmatpush.msra.mxu0 %v1295
    %v1297 = vand.u32 %v1242, 4294901760
    %1298 = vmatmul.f32.gmra.mxu0 %v1297
    %v1299 = vpop.f32.mrf.mxu0
    %v1300 = vadd.f32 %v1269, %v1299
    %1301 = vdwg.mxu0
    %1302 = vmatpush.msra.mxu0 0.0
    %1303 = vmatpush.msra.mxu0 0.0
    %1304 = vmatpush.msra.mxu0 0.0
    %1305 = vmatpush.msra.mxu0 0.0
    %1306 = vmatpush.msra.mxu0 0.0
    %1307 = vmatpush.msra.mxu0 0.0
    %1308 = vmatpush.msra.mxu0 0.0
    %1309 = vmatpush.msra.mxu0 0.0
    %1310 = vmatpush.msra.mxu0 0.0
    %1311 = vmatpush.msra.mxu0 0.0
    %1312 = vmatpush.msra.mxu0 0.0
    %1313 = vmatpush.msra.mxu0 0.0
    %1314 = vmatpush.msra.mxu0 0.0
    %1315 = vmatpush.msra.mxu0 0.0
    %v1316 = vand.u32 %v141, 4294901760
    %v1317 = vsub.f32 %v141, %v1316
    %1318 = vmatpush.msra.mxu0 %v1317
    %v1319 = vand.u32 %v140, 4294901760
    %v1320 = vsub.f32 %v140, %v1319
    %1321 = vmatpush.msra.mxu0 %v1320
    %v1322 = vand.u32 %v1242, 4294901760
    %v1323 = vsub.f32 %v1242, %v1322
    %1324 = vmatmul.f32.gmra.mxu0 %v1323
    %v1325 = vpop.f32.mrf.mxu0
    %v1326 = vadd.f32 %v1300, %v1325
    %1327 = vdwg.mxu0
    %1328 = vmatpush.msra.mxu0 0.0
    %1329 = vmatpush.msra.mxu0 0.0
    %1330 = vmatpush.msra.mxu0 0.0
    %1331 = vmatpush.msra.mxu0 0.0
    %1332 = vmatpush.msra.mxu0 0.0
    %1333 = vmatpush.msra.mxu0 0.0
    %1334 = vmatpush.msra.mxu0 0.0
    %1335 = vmatpush.msra.mxu0 0.0
    %1336 = vmatpush.msra.mxu0 0.0
    %1337 = vmatpush.msra.mxu0 0.0
    %1338 = vmatpush.msra.mxu0 0.0
    %1339 = vmatpush.msra.mxu0 0.0
    %1340 = vmatpush.msra.mxu0 0.0
    %1341 = vmatpush.msra.mxu0 0.0
    %v1342 = vand.u32 %v141, 4294901760
    %1343 = vmatpush.msra.mxu0 %v1342
    %v1344 = vand.u32 %v140, 4294901760
    %1345 = vmatpush.msra.mxu0 %v1344
    %v1346 = vand.u32 %v1242, 4294901760
    %v1347 = vsub.f32 %v1242, %v1346
    %v1348 = vand.u32 %v1347, 4294901760
    %1349 = vmatmul.f32.gmra.mxu0 %v1348
    %v1350 = vpop.f32.mrf.mxu0
    %v1351 = vadd.f32 %v1326, %v1350
    %1352 = vdwg.mxu0
    %1353 = vmatpush.msra.mxu0 0.0
    %1354 = vmatpush.msra.mxu0 0.0
    %1355 = vmatpush.msra.mxu0 0.0
    %1356 = vmatpush.msra.mxu0 0.0
    %1357 = vmatpush.msra.mxu0 0.0
    %1358 = vmatpush.msra.mxu0 0.0
    %1359 = vmatpush.msra.mxu0 0.0
    %1360 = vmatpush.msra.mxu0 0.0
    %1361 = vmatpush.msra.mxu0 0.0
    %1362 = vmatpush.msra.mxu0 0.0
    %1363 = vmatpush.msra.mxu0 0.0
    %1364 = vmatpush.msra.mxu0 0.0
    %1365 = vmatpush.msra.mxu0 0.0
    %1366 = vmatpush.msra.mxu0 0.0
    %v1367 = vand.u32 %v141, 4294901760
    %v1368 = vsub.f32 %v141, %v1367
    %v1369 = vand.u32 %v1368, 4294901760
    %1370 = vmatpush.msra.mxu0 %v1369
    %v1371 = vand.u32 %v140, 4294901760
    %v1372 = vsub.f32 %v140, %v1371
    %v1373 = vand.u32 %v1372, 4294901760
    %1374 = vmatpush.msra.mxu0 %v1373
    %v1375 = vand.u32 %v1242, 4294901760
    %1376 = vmatmul.f32.gmra.mxu0 %v1375
    %v1377 = vpop.f32.mrf.mxu0
    %v1378 = vadd.f32 %v1351, %v1377
    %1379 = vdwg.mxu0
    %1380 = vmatpush.msra.mxu0 0.0
    %1381 = vmatpush.msra.mxu0 0.0
    %1382 = vmatpush.msra.mxu0 0.0
    %1383 = vmatpush.msra.mxu0 0.0
    %1384 = vmatpush.msra.mxu0 0.0
    %1385 = vmatpush.msra.mxu0 0.0
    %1386 = vmatpush.msra.mxu0 0.0
    %1387 = vmatpush.msra.mxu0 0.0
    %1388 = vmatpush.msra.mxu0 0.0
    %1389 = vmatpush.msra.mxu0 0.0
    %1390 = vmatpush.msra.mxu0 0.0
    %1391 = vmatpush.msra.mxu0 0.0
    %1392 = vmatpush.msra.mxu0 0.0
    %1393 = vmatpush.msra.mxu0 0.0
    %v1394 = vand.u32 %v141, 4294901760
    %1395 = vmatpush.msra.mxu0 %v1394
    %v1396 = vand.u32 %v140, 4294901760
    %1397 = vmatpush.msra.mxu0 %v1396
    %v1398 = vand.u32 %v1242, 4294901760
    %1399 = vmatmul.f32.gmra.mxu0 %v1398
    %v1400 = vpop.f32.mrf.mxu0
    %v1401 = vadd.f32 %v1378, %v1400
    %1402 = vdwg.mxu0
    %v1404 = vsel %vm470, %v1401, 0
    %1406 = vmatpush.msra.mxu0 0.0
    %1407 = vmatpush.msra.mxu0 0.0
    %1408 = vmatpush.msra.mxu0 0.0
    %1409 = vmatpush.msra.mxu0 0.0
    %1410 = vmatpush.msra.mxu0 0.0
    %1411 = vmatpush.msra.mxu0 0.0
    %1412 = vmatpush.msra.mxu0 0.0
    %1413 = vmatpush.msra.mxu0 0.0
    %1414 = vmatpush.msra.mxu0 0.0
    %1415 = vmatpush.msra.mxu0 0.0
    %1416 = vmatpush.msra.mxu0 0.0
    %1417 = vmatpush.msra.mxu0 0.0
    %1418 = vmatpush.msra.mxu0 0.0
    %1419 = vmatpush.msra.mxu0 0.0
    %1420 = vmatpush.msra.mxu0 0.0
    %v1421 = vand.u32 %v476, 4294901760
    %1422 = vmatpush.msra.mxu0 %v1421
    %v1423 = vand.u32 %v1404, 4294901760
    %v1424 = vsub.f32 %v1404, %v1423
    %v1425 = vand.u32 %v1424, 4294901760
    %v1426 = vsub.f32 %v1424, %v1425
    %v1427 = vand.u32 %v1426, 4294901760
    %1428 = vmatmul.f32.gmra.mxu0 %v1427
    %v1429 = vpop.f32.mrf.mxu0
    %v1430 = vadd.f32 0.0, %v1429
    %1431 = vdwg.mxu0
    %1432 = vmatpush.msra.mxu0 0.0
    %1433 = vmatpush.msra.mxu0 0.0
    %1434 = vmatpush.msra.mxu0 0.0
    %1435 = vmatpush.msra.mxu0 0.0
    %1436 = vmatpush.msra.mxu0 0.0
    %1437 = vmatpush.msra.mxu0 0.0
    %1438 = vmatpush.msra.mxu0 0.0
    %1439 = vmatpush.msra.mxu0 0.0
    %1440 = vmatpush.msra.mxu0 0.0
    %1441 = vmatpush.msra.mxu0 0.0
    %1442 = vmatpush.msra.mxu0 0.0
    %1443 = vmatpush.msra.mxu0 0.0
    %1444 = vmatpush.msra.mxu0 0.0
    %1445 = vmatpush.msra.mxu0 0.0
    %1446 = vmatpush.msra.mxu0 0.0
    %v1447 = vand.u32 %v476, 4294901760
    %v1448 = vsub.f32 %v476, %v1447
    %v1449 = vand.u32 %v1448, 4294901760
    %v1450 = vsub.f32 %v1448, %v1449
    %v1451 = vand.u32 %v1450, 4294901760
    %1452 = vmatpush.msra.mxu0 %v1451
    %v1453 = vand.u32 %v1404, 4294901760
    %1454 = vmatmul.f32.gmra.mxu0 %v1453
    %v1455 = vpop.f32.mrf.mxu0
    %v1456 = vadd.f32 %v1430, %v1455
    %1457 = vdwg.mxu0
    %1458 = vmatpush.msra.mxu0 0.0
    %1459 = vmatpush.msra.mxu0 0.0
    %1460 = vmatpush.msra.mxu0 0.0
    %1461 = vmatpush.msra.mxu0 0.0
    %1462 = vmatpush.msra.mxu0 0.0
    %1463 = vmatpush.msra.mxu0 0.0
    %1464 = vmatpush.msra.mxu0 0.0
    %1465 = vmatpush.msra.mxu0 0.0
    %1466 = vmatpush.msra.mxu0 0.0
    %1467 = vmatpush.msra.mxu0 0.0
    %1468 = vmatpush.msra.mxu0 0.0
    %1469 = vmatpush.msra.mxu0 0.0
    %1470 = vmatpush.msra.mxu0 0.0
    %1471 = vmatpush.msra.mxu0 0.0
    %1472 = vmatpush.msra.mxu0 0.0
    %v1473 = vand.u32 %v476, 4294901760
    %v1474 = vsub.f32 %v476, %v1473
    %1475 = vmatpush.msra.mxu0 %v1474
    %v1476 = vand.u32 %v1404, 4294901760
    %v1477 = vsub.f32 %v1404, %v1476
    %1478 = vmatmul.f32.gmra.mxu0 %v1477
    %v1479 = vpop.f32.mrf.mxu0
    %v1480 = vadd.f32 %v1456, %v1479
    %1481 = vdwg.mxu0
    %1482 = vmatpush.msra.mxu0 0.0
    %1483 = vmatpush.msra.mxu0 0.0
    %1484 = vmatpush.msra.mxu0 0.0
    %1485 = vmatpush.msra.mxu0 0.0
    %1486 = vmatpush.msra.mxu0 0.0
    %1487 = vmatpush.msra.mxu0 0.0
    %1488 = vmatpush.msra.mxu0 0.0
    %1489 = vmatpush.msra.mxu0 0.0
    %1490 = vmatpush.msra.mxu0 0.0
    %1491 = vmatpush.msra.mxu0 0.0
    %1492 = vmatpush.msra.mxu0 0.0
    %1493 = vmatpush.msra.mxu0 0.0
    %1494 = vmatpush.msra.mxu0 0.0
    %1495 = vmatpush.msra.mxu0 0.0
    %1496 = vmatpush.msra.mxu0 0.0
    %v1497 = vand.u32 %v476, 4294901760
    %1498 = vmatpush.msra.mxu0 %v1497
    %v1499 = vand.u32 %v1404, 4294901760
    %v1500 = vsub.f32 %v1404, %v1499
    %v1501 = vand.u32 %v1500, 4294901760
    %1502 = vmatmul.f32.gmra.mxu0 %v1501
    %v1503 = vpop.f32.mrf.mxu0
    %v1504 = vadd.f32 %v1480, %v1503
    %1505 = vdwg.mxu0
    %1506 = vmatpush.msra.mxu0 0.0
    %1507 = vmatpush.msra.mxu0 0.0
    %1508 = vmatpush.msra.mxu0 0.0
    %1509 = vmatpush.msra.mxu0 0.0
    %1510 = vmatpush.msra.mxu0 0.0
    %1511 = vmatpush.msra.mxu0 0.0
    %1512 = vmatpush.msra.mxu0 0.0
    %1513 = vmatpush.msra.mxu0 0.0
    %1514 = vmatpush.msra.mxu0 0.0
    %1515 = vmatpush.msra.mxu0 0.0
    %1516 = vmatpush.msra.mxu0 0.0
    %1517 = vmatpush.msra.mxu0 0.0
    %1518 = vmatpush.msra.mxu0 0.0
    %1519 = vmatpush.msra.mxu0 0.0
    %1520 = vmatpush.msra.mxu0 0.0
    %v1521 = vand.u32 %v476, 4294901760
    %v1522 = vsub.f32 %v476, %v1521
    %v1523 = vand.u32 %v1522, 4294901760
    %1524 = vmatpush.msra.mxu0 %v1523
    %v1525 = vand.u32 %v1404, 4294901760
    %1526 = vmatmul.f32.gmra.mxu0 %v1525
    %v1527 = vpop.f32.mrf.mxu0
    %v1528 = vadd.f32 %v1504, %v1527
    %1529 = vdwg.mxu0
    %1530 = vmatpush.msra.mxu0 0.0
    %1531 = vmatpush.msra.mxu0 0.0
    %1532 = vmatpush.msra.mxu0 0.0
    %1533 = vmatpush.msra.mxu0 0.0
    %1534 = vmatpush.msra.mxu0 0.0
    %1535 = vmatpush.msra.mxu0 0.0
    %1536 = vmatpush.msra.mxu0 0.0
    %1537 = vmatpush.msra.mxu0 0.0
    %1538 = vmatpush.msra.mxu0 0.0
    %1539 = vmatpush.msra.mxu0 0.0
    %1540 = vmatpush.msra.mxu0 0.0
    %1541 = vmatpush.msra.mxu0 0.0
    %1542 = vmatpush.msra.mxu0 0.0
    %1543 = vmatpush.msra.mxu0 0.0
    %1544 = vmatpush.msra.mxu0 0.0
    %v1545 = vand.u32 %v476, 4294901760
    %1546 = vmatpush.msra.mxu0 %v1545
    %v1547 = vand.u32 %v1404, 4294901760
    %1548 = vmatmul.f32.gmra.mxu0 %v1547
    %v1549 = vpop.f32.mrf.mxu0
    %v1550 = vadd.f32 %v1528, %v1549
    %1551 = vdwg.mxu0
    %1552 = vmatpush.msra.mxu0 0.0
    %1553 = vmatpush.msra.mxu0 0.0
    %1554 = vmatpush.msra.mxu0 0.0
    %1555 = vmatpush.msra.mxu0 0.0
    %1556 = vmatpush.msra.mxu0 0.0
    %1557 = vmatpush.msra.mxu0 0.0
    %1558 = vmatpush.msra.mxu0 0.0
    %1559 = vmatpush.msra.mxu0 0.0
    %1560 = vmatpush.msra.mxu0 0.0
    %1561 = vmatpush.msra.mxu0 0.0
    %1562 = vmatpush.msra.mxu0 0.0
    %1563 = vmatpush.msra.mxu0 0.0
    %1564 = vmatpush.msra.mxu0 0.0
    %1565 = vmatpush.msra.mxu0 0.0
    %1566 = vmatpush.msra.mxu0 0.0
    %v1567 = vand.u32 %v625, 4294901760
    %1568 = vmatpush.msra.mxu0 %v1567
    %v1569 = vand.u32 %v1404, 4294901760
    %v1570 = vsub.f32 %v1404, %v1569
    %v1571 = vand.u32 %v1570, 4294901760
    %v1572 = vsub.f32 %v1570, %v1571
    %v1573 = vand.u32 %v1572, 4294901760
    %1574 = vmatmul.f32.gmra.mxu0 %v1573
    %v1575 = vpop.f32.mrf.mxu0
    %v1576 = vadd.f32 0.0, %v1575
    %1577 = vdwg.mxu0
    %1578 = vmatpush.msra.mxu0 0.0
    %1579 = vmatpush.msra.mxu0 0.0
    %1580 = vmatpush.msra.mxu0 0.0
    %1581 = vmatpush.msra.mxu0 0.0
    %1582 = vmatpush.msra.mxu0 0.0
    %1583 = vmatpush.msra.mxu0 0.0
    %1584 = vmatpush.msra.mxu0 0.0
    %1585 = vmatpush.msra.mxu0 0.0
    %1586 = vmatpush.msra.mxu0 0.0
    %1587 = vmatpush.msra.mxu0 0.0
    %1588 = vmatpush.msra.mxu0 0.0
    %1589 = vmatpush.msra.mxu0 0.0
    %1590 = vmatpush.msra.mxu0 0.0
    %1591 = vmatpush.msra.mxu0 0.0
    %1592 = vmatpush.msra.mxu0 0.0
    %v1593 = vand.u32 %v625, 4294901760
    %v1594 = vsub.f32 %v625, %v1593
    %v1595 = vand.u32 %v1594, 4294901760
    %v1596 = vsub.f32 %v1594, %v1595
    %v1597 = vand.u32 %v1596, 4294901760
    %1598 = vmatpush.msra.mxu0 %v1597
    %v1599 = vand.u32 %v1404, 4294901760
    %1600 = vmatmul.f32.gmra.mxu0 %v1599
    %v1601 = vpop.f32.mrf.mxu0
    %v1602 = vadd.f32 %v1576, %v1601
    %1603 = vdwg.mxu0
    %1604 = vmatpush.msra.mxu0 0.0
    %1605 = vmatpush.msra.mxu0 0.0
    %1606 = vmatpush.msra.mxu0 0.0
    %1607 = vmatpush.msra.mxu0 0.0
    %1608 = vmatpush.msra.mxu0 0.0
    %1609 = vmatpush.msra.mxu0 0.0
    %1610 = vmatpush.msra.mxu0 0.0
    %1611 = vmatpush.msra.mxu0 0.0
    %1612 = vmatpush.msra.mxu0 0.0
    %1613 = vmatpush.msra.mxu0 0.0
    %1614 = vmatpush.msra.mxu0 0.0
    %1615 = vmatpush.msra.mxu0 0.0
    %1616 = vmatpush.msra.mxu0 0.0
    %1617 = vmatpush.msra.mxu0 0.0
    %1618 = vmatpush.msra.mxu0 0.0
    %v1619 = vand.u32 %v625, 4294901760
    %v1620 = vsub.f32 %v625, %v1619
    %1621 = vmatpush.msra.mxu0 %v1620
    %v1622 = vand.u32 %v1404, 4294901760
    %v1623 = vsub.f32 %v1404, %v1622
    %1624 = vmatmul.f32.gmra.mxu0 %v1623
    %v1625 = vpop.f32.mrf.mxu0
    %v1626 = vadd.f32 %v1602, %v1625
    %1627 = vdwg.mxu0
    %1628 = vmatpush.msra.mxu0 0.0
    %1629 = vmatpush.msra.mxu0 0.0
    %1630 = vmatpush.msra.mxu0 0.0
    %1631 = vmatpush.msra.mxu0 0.0
    %1632 = vmatpush.msra.mxu0 0.0
    %1633 = vmatpush.msra.mxu0 0.0
    %1634 = vmatpush.msra.mxu0 0.0
    %1635 = vmatpush.msra.mxu0 0.0
    %1636 = vmatpush.msra.mxu0 0.0
    %1637 = vmatpush.msra.mxu0 0.0
    %1638 = vmatpush.msra.mxu0 0.0
    %1639 = vmatpush.msra.mxu0 0.0
    %1640 = vmatpush.msra.mxu0 0.0
    %1641 = vmatpush.msra.mxu0 0.0
    %1642 = vmatpush.msra.mxu0 0.0
    %v1643 = vand.u32 %v625, 4294901760
    %1644 = vmatpush.msra.mxu0 %v1643
    %v1645 = vand.u32 %v1404, 4294901760
    %v1646 = vsub.f32 %v1404, %v1645
    %v1647 = vand.u32 %v1646, 4294901760
    %1648 = vmatmul.f32.gmra.mxu0 %v1647
    %v1649 = vpop.f32.mrf.mxu0
    %v1650 = vadd.f32 %v1626, %v1649
    %1651 = vdwg.mxu0
    %1652 = vmatpush.msra.mxu0 0.0
    %1653 = vmatpush.msra.mxu0 0.0
    %1654 = vmatpush.msra.mxu0 0.0
    %1655 = vmatpush.msra.mxu0 0.0
    %1656 = vmatpush.msra.mxu0 0.0
    %1657 = vmatpush.msra.mxu0 0.0
    %1658 = vmatpush.msra.mxu0 0.0
    %1659 = vmatpush.msra.mxu0 0.0
    %1660 = vmatpush.msra.mxu0 0.0
    %1661 = vmatpush.msra.mxu0 0.0
    %1662 = vmatpush.msra.mxu0 0.0
    %1663 = vmatpush.msra.mxu0 0.0
    %1664 = vmatpush.msra.mxu0 0.0
    %1665 = vmatpush.msra.mxu0 0.0
    %1666 = vmatpush.msra.mxu0 0.0
    %v1667 = vand.u32 %v625, 4294901760
    %v1668 = vsub.f32 %v625, %v1667
    %v1669 = vand.u32 %v1668, 4294901760
    %1670 = vmatpush.msra.mxu0 %v1669
    %v1671 = vand.u32 %v1404, 4294901760
    %1672 = vmatmul.f32.gmra.mxu0 %v1671
    %v1673 = vpop.f32.mrf.mxu0
    %v1674 = vadd.f32 %v1650, %v1673
    %1675 = vdwg.mxu0
    %1676 = vmatpush.msra.mxu0 0.0
    %1677 = vmatpush.msra.mxu0 0.0
    %1678 = vmatpush.msra.mxu0 0.0
    %1679 = vmatpush.msra.mxu0 0.0
    %1680 = vmatpush.msra.mxu0 0.0
    %1681 = vmatpush.msra.mxu0 0.0
    %1682 = vmatpush.msra.mxu0 0.0
    %1683 = vmatpush.msra.mxu0 0.0
    %1684 = vmatpush.msra.mxu0 0.0
    %1685 = vmatpush.msra.mxu0 0.0
    %1686 = vmatpush.msra.mxu0 0.0
    %1687 = vmatpush.msra.mxu0 0.0
    %1688 = vmatpush.msra.mxu0 0.0
    %1689 = vmatpush.msra.mxu0 0.0
    %1690 = vmatpush.msra.mxu0 0.0
    %v1691 = vand.u32 %v625, 4294901760
    %1692 = vmatpush.msra.mxu0 %v1691
    %v1693 = vand.u32 %v1404, 4294901760
    %1694 = vmatmul.f32.gmra.mxu0 %v1693
    %v1695 = vpop.f32.mrf.mxu0
    %v1696 = vadd.f32 %v1674, %v1695
    %1697 = vdwg.mxu0
    %v1698 = vsel %vm474, %v1401, 0
    %1700 = vmatpush.msra.mxu0 0.0
    %1701 = vmatpush.msra.mxu0 0.0
    %1702 = vmatpush.msra.mxu0 0.0
    %1703 = vmatpush.msra.mxu0 0.0
    %1704 = vmatpush.msra.mxu0 0.0
    %1705 = vmatpush.msra.mxu0 0.0
    %1706 = vmatpush.msra.mxu0 0.0
    %1707 = vmatpush.msra.mxu0 0.0
    %1708 = vmatpush.msra.mxu0 0.0
    %1709 = vmatpush.msra.mxu0 0.0
    %1710 = vmatpush.msra.mxu0 0.0
    %1711 = vmatpush.msra.mxu0 0.0
    %1712 = vmatpush.msra.mxu0 0.0
    %1713 = vmatpush.msra.mxu0 0.0
    %1714 = vmatpush.msra.mxu0 0.0
    %v1715 = vand.u32 %v1698, 4294901760
    %1716 = vmatpush.msra.mxu0 %v1715
    %v1717 = vand.u32 %v774, 4294901760
    %v1718 = vsub.f32 %v774, %v1717
    %v1719 = vand.u32 %v1718, 4294901760
    %v1720 = vsub.f32 %v1718, %v1719
    %v1721 = vand.u32 %v1720, 4294901760
    %1722 = vmatmul.f32.gmra.mxu0 %v1721
    %v1723 = vpop.f32.mrf.mxu0
    %v1724 = vadd.f32 0.0, %v1723
    %1725 = vdwg.mxu0
    %1726 = vmatpush.msra.mxu0 0.0
    %1727 = vmatpush.msra.mxu0 0.0
    %1728 = vmatpush.msra.mxu0 0.0
    %1729 = vmatpush.msra.mxu0 0.0
    %1730 = vmatpush.msra.mxu0 0.0
    %1731 = vmatpush.msra.mxu0 0.0
    %1732 = vmatpush.msra.mxu0 0.0
    %1733 = vmatpush.msra.mxu0 0.0
    %1734 = vmatpush.msra.mxu0 0.0
    %1735 = vmatpush.msra.mxu0 0.0
    %1736 = vmatpush.msra.mxu0 0.0
    %1737 = vmatpush.msra.mxu0 0.0
    %1738 = vmatpush.msra.mxu0 0.0
    %1739 = vmatpush.msra.mxu0 0.0
    %1740 = vmatpush.msra.mxu0 0.0
    %v1741 = vand.u32 %v1698, 4294901760
    %v1742 = vsub.f32 %v1698, %v1741
    %v1743 = vand.u32 %v1742, 4294901760
    %v1744 = vsub.f32 %v1742, %v1743
    %v1745 = vand.u32 %v1744, 4294901760
    %1746 = vmatpush.msra.mxu0 %v1745
    %v1747 = vand.u32 %v774, 4294901760
    %1748 = vmatmul.f32.gmra.mxu0 %v1747
    %v1749 = vpop.f32.mrf.mxu0
    %v1750 = vadd.f32 %v1724, %v1749
    %1751 = vdwg.mxu0
    %1752 = vmatpush.msra.mxu0 0.0
    %1753 = vmatpush.msra.mxu0 0.0
    %1754 = vmatpush.msra.mxu0 0.0
    %1755 = vmatpush.msra.mxu0 0.0
    %1756 = vmatpush.msra.mxu0 0.0
    %1757 = vmatpush.msra.mxu0 0.0
    %1758 = vmatpush.msra.mxu0 0.0
    %1759 = vmatpush.msra.mxu0 0.0
    %1760 = vmatpush.msra.mxu0 0.0
    %1761 = vmatpush.msra.mxu0 0.0
    %1762 = vmatpush.msra.mxu0 0.0
    %1763 = vmatpush.msra.mxu0 0.0
    %1764 = vmatpush.msra.mxu0 0.0
    %1765 = vmatpush.msra.mxu0 0.0
    %1766 = vmatpush.msra.mxu0 0.0
    %v1767 = vand.u32 %v1698, 4294901760
    %v1768 = vsub.f32 %v1698, %v1767
    %1769 = vmatpush.msra.mxu0 %v1768
    %v1770 = vand.u32 %v774, 4294901760
    %v1771 = vsub.f32 %v774, %v1770
    %1772 = vmatmul.f32.gmra.mxu0 %v1771
    %v1773 = vpop.f32.mrf.mxu0
    %v1774 = vadd.f32 %v1750, %v1773
    %1775 = vdwg.mxu0
    %1776 = vmatpush.msra.mxu0 0.0
    %1777 = vmatpush.msra.mxu0 0.0
    %1778 = vmatpush.msra.mxu0 0.0
    %1779 = vmatpush.msra.mxu0 0.0
    %1780 = vmatpush.msra.mxu0 0.0
    %1781 = vmatpush.msra.mxu0 0.0
    %1782 = vmatpush.msra.mxu0 0.0
    %1783 = vmatpush.msra.mxu0 0.0
    %1784 = vmatpush.msra.mxu0 0.0
    %1785 = vmatpush.msra.mxu0 0.0
    %1786 = vmatpush.msra.mxu0 0.0
    %1787 = vmatpush.msra.mxu0 0.0
    %1788 = vmatpush.msra.mxu0 0.0
    %1789 = vmatpush.msra.mxu0 0.0
    %1790 = vmatpush.msra.mxu0 0.0
    %v1791 = vand.u32 %v1698, 4294901760
    %1792 = vmatpush.msra.mxu0 %v1791
    %v1793 = vand.u32 %v774, 4294901760
    %v1794 = vsub.f32 %v774, %v1793
    %v1795 = vand.u32 %v1794, 4294901760
    %1796 = vmatmul.f32.gmra.mxu0 %v1795
    %v1797 = vpop.f32.mrf.mxu0
    %v1798 = vadd.f32 %v1774, %v1797
    %1799 = vdwg.mxu0
    %1800 = vmatpush.msra.mxu0 0.0
    %1801 = vmatpush.msra.mxu0 0.0
    %1802 = vmatpush.msra.mxu0 0.0
    %1803 = vmatpush.msra.mxu0 0.0
    %1804 = vmatpush.msra.mxu0 0.0
    %1805 = vmatpush.msra.mxu0 0.0
    %1806 = vmatpush.msra.mxu0 0.0
    %1807 = vmatpush.msra.mxu0 0.0
    %1808 = vmatpush.msra.mxu0 0.0
    %1809 = vmatpush.msra.mxu0 0.0
    %1810 = vmatpush.msra.mxu0 0.0
    %1811 = vmatpush.msra.mxu0 0.0
    %1812 = vmatpush.msra.mxu0 0.0
    %1813 = vmatpush.msra.mxu0 0.0
    %1814 = vmatpush.msra.mxu0 0.0
    %v1815 = vand.u32 %v1698, 4294901760
    %v1816 = vsub.f32 %v1698, %v1815
    %v1817 = vand.u32 %v1816, 4294901760
    %1818 = vmatpush.msra.mxu0 %v1817
    %v1819 = vand.u32 %v774, 4294901760
    %1820 = vmatmul.f32.gmra.mxu0 %v1819
    %v1821 = vpop.f32.mrf.mxu0
    %v1822 = vadd.f32 %v1798, %v1821
    %1823 = vdwg.mxu0
    %1824 = vmatpush.msra.mxu0 0.0
    %1825 = vmatpush.msra.mxu0 0.0
    %1826 = vmatpush.msra.mxu0 0.0
    %1827 = vmatpush.msra.mxu0 0.0
    %1828 = vmatpush.msra.mxu0 0.0
    %1829 = vmatpush.msra.mxu0 0.0
    %1830 = vmatpush.msra.mxu0 0.0
    %1831 = vmatpush.msra.mxu0 0.0
    %1832 = vmatpush.msra.mxu0 0.0
    %1833 = vmatpush.msra.mxu0 0.0
    %1834 = vmatpush.msra.mxu0 0.0
    %1835 = vmatpush.msra.mxu0 0.0
    %1836 = vmatpush.msra.mxu0 0.0
    %1837 = vmatpush.msra.mxu0 0.0
    %1838 = vmatpush.msra.mxu0 0.0
    %v1839 = vand.u32 %v1698, 4294901760
    %1840 = vmatpush.msra.mxu0 %v1839
    %v1841 = vand.u32 %v774, 4294901760
    %1842 = vmatmul.f32.gmra.mxu0 %v1841
    %v1843 = vpop.f32.mrf.mxu0
    %v1844 = vadd.f32 %v1822, %v1843
    %1845 = vdwg.mxu0
    %1846 = vmatpush.msra.mxu0 0.0
    %1847 = vmatpush.msra.mxu0 0.0
    %1848 = vmatpush.msra.mxu0 0.0
    %1849 = vmatpush.msra.mxu0 0.0
    %1850 = vmatpush.msra.mxu0 0.0
    %1851 = vmatpush.msra.mxu0 0.0
    %1852 = vmatpush.msra.mxu0 0.0
    %1853 = vmatpush.msra.mxu0 0.0
    %1854 = vmatpush.msra.mxu0 0.0
    %1855 = vmatpush.msra.mxu0 0.0
    %1856 = vmatpush.msra.mxu0 0.0
    %1857 = vmatpush.msra.mxu0 0.0
    %1858 = vmatpush.msra.mxu0 0.0
    %1859 = vmatpush.msra.mxu0 0.0
    %1860 = vmatpush.msra.mxu0 0.0
    %v1861 = vand.u32 %v1698, 4294901760
    %1862 = vmatpush.msra.mxu0 %v1861
    %v1863 = vand.u32 %v925, 4294901760
    %v1864 = vsub.f32 %v925, %v1863
    %v1865 = vand.u32 %v1864, 4294901760
    %v1866 = vsub.f32 %v1864, %v1865
    %v1867 = vand.u32 %v1866, 4294901760
    %1868 = vmatmul.f32.gmra.mxu0 %v1867
    %v1869 = vpop.f32.mrf.mxu0
    %v1870 = vadd.f32 0.0, %v1869
    %1871 = vdwg.mxu0
    %1872 = vmatpush.msra.mxu0 0.0
    %1873 = vmatpush.msra.mxu0 0.0
    %1874 = vmatpush.msra.mxu0 0.0
    %1875 = vmatpush.msra.mxu0 0.0
    %1876 = vmatpush.msra.mxu0 0.0
    %1877 = vmatpush.msra.mxu0 0.0
    %1878 = vmatpush.msra.mxu0 0.0
    %1879 = vmatpush.msra.mxu0 0.0
    %1880 = vmatpush.msra.mxu0 0.0
    %1881 = vmatpush.msra.mxu0 0.0
    %1882 = vmatpush.msra.mxu0 0.0
    %1883 = vmatpush.msra.mxu0 0.0
    %1884 = vmatpush.msra.mxu0 0.0
    %1885 = vmatpush.msra.mxu0 0.0
    %1886 = vmatpush.msra.mxu0 0.0
    %v1887 = vand.u32 %v1698, 4294901760
    %v1888 = vsub.f32 %v1698, %v1887
    %v1889 = vand.u32 %v1888, 4294901760
    %v1890 = vsub.f32 %v1888, %v1889
    %v1891 = vand.u32 %v1890, 4294901760
    %1892 = vmatpush.msra.mxu0 %v1891
    %v1893 = vand.u32 %v925, 4294901760
    %1894 = vmatmul.f32.gmra.mxu0 %v1893
    %v1895 = vpop.f32.mrf.mxu0
    %v1896 = vadd.f32 %v1870, %v1895
    %1897 = vdwg.mxu0
    %1898 = vmatpush.msra.mxu0 0.0
    %1899 = vmatpush.msra.mxu0 0.0
    %1900 = vmatpush.msra.mxu0 0.0
    %1901 = vmatpush.msra.mxu0 0.0
    %1902 = vmatpush.msra.mxu0 0.0
    %1903 = vmatpush.msra.mxu0 0.0
    %1904 = vmatpush.msra.mxu0 0.0
    %1905 = vmatpush.msra.mxu0 0.0
    %1906 = vmatpush.msra.mxu0 0.0
    %1907 = vmatpush.msra.mxu0 0.0
    %1908 = vmatpush.msra.mxu0 0.0
    %1909 = vmatpush.msra.mxu0 0.0
    %1910 = vmatpush.msra.mxu0 0.0
    %1911 = vmatpush.msra.mxu0 0.0
    %1912 = vmatpush.msra.mxu0 0.0
    %v1913 = vand.u32 %v1698, 4294901760
    %v1914 = vsub.f32 %v1698, %v1913
    %1915 = vmatpush.msra.mxu0 %v1914
    %v1916 = vand.u32 %v925, 4294901760
    %v1917 = vsub.f32 %v925, %v1916
    %1918 = vmatmul.f32.gmra.mxu0 %v1917
    %v1919 = vpop.f32.mrf.mxu0
    %v1920 = vadd.f32 %v1896, %v1919
    %1921 = vdwg.mxu0
    %1922 = vmatpush.msra.mxu0 0.0
    %1923 = vmatpush.msra.mxu0 0.0
    %1924 = vmatpush.msra.mxu0 0.0
    %1925 = vmatpush.msra.mxu0 0.0
    %1926 = vmatpush.msra.mxu0 0.0
    %1927 = vmatpush.msra.mxu0 0.0
    %1928 = vmatpush.msra.mxu0 0.0
    %1929 = vmatpush.msra.mxu0 0.0
    %1930 = vmatpush.msra.mxu0 0.0
    %1931 = vmatpush.msra.mxu0 0.0
    %1932 = vmatpush.msra.mxu0 0.0
    %1933 = vmatpush.msra.mxu0 0.0
    %1934 = vmatpush.msra.mxu0 0.0
    %1935 = vmatpush.msra.mxu0 0.0
    %1936 = vmatpush.msra.mxu0 0.0
    %v1937 = vand.u32 %v1698, 4294901760
    %1938 = vmatpush.msra.mxu0 %v1937
    %v1939 = vand.u32 %v925, 4294901760
    %v1940 = vsub.f32 %v925, %v1939
    %v1941 = vand.u32 %v1940, 4294901760
    %1942 = vmatmul.f32.gmra.mxu0 %v1941
    %v1943 = vpop.f32.mrf.mxu0
    %v1944 = vadd.f32 %v1920, %v1943
    %1945 = vdwg.mxu0
    %1946 = vmatpush.msra.mxu0 0.0
    %1947 = vmatpush.msra.mxu0 0.0
    %1948 = vmatpush.msra.mxu0 0.0
    %1949 = vmatpush.msra.mxu0 0.0
    %1950 = vmatpush.msra.mxu0 0.0
    %1951 = vmatpush.msra.mxu0 0.0
    %1952 = vmatpush.msra.mxu0 0.0
    %1953 = vmatpush.msra.mxu0 0.0
    %1954 = vmatpush.msra.mxu0 0.0
    %1955 = vmatpush.msra.mxu0 0.0
    %1956 = vmatpush.msra.mxu0 0.0
    %1957 = vmatpush.msra.mxu0 0.0
    %1958 = vmatpush.msra.mxu0 0.0
    %1959 = vmatpush.msra.mxu0 0.0
    %1960 = vmatpush.msra.mxu0 0.0
    %v1961 = vand.u32 %v1698, 4294901760
    %v1962 = vsub.f32 %v1698, %v1961
    %v1963 = vand.u32 %v1962, 4294901760
    %1964 = vmatpush.msra.mxu0 %v1963
    %v1965 = vand.u32 %v925, 4294901760
    %1966 = vmatmul.f32.gmra.mxu0 %v1965
    %v1967 = vpop.f32.mrf.mxu0
    %v1968 = vadd.f32 %v1944, %v1967
    %1969 = vdwg.mxu0
    %1970 = vmatpush.msra.mxu0 0.0
    %1971 = vmatpush.msra.mxu0 0.0
    %1972 = vmatpush.msra.mxu0 0.0
    %1973 = vmatpush.msra.mxu0 0.0
    %1974 = vmatpush.msra.mxu0 0.0
    %1975 = vmatpush.msra.mxu0 0.0
    %1976 = vmatpush.msra.mxu0 0.0
    %1977 = vmatpush.msra.mxu0 0.0
    %1978 = vmatpush.msra.mxu0 0.0
    %1979 = vmatpush.msra.mxu0 0.0
    %1980 = vmatpush.msra.mxu0 0.0
    %1981 = vmatpush.msra.mxu0 0.0
    %1982 = vmatpush.msra.mxu0 0.0
    %1983 = vmatpush.msra.mxu0 0.0
    %1984 = vmatpush.msra.mxu0 0.0
    %v1985 = vand.u32 %v1698, 4294901760
    %1986 = vmatpush.msra.mxu0 %v1985
    %v1987 = vand.u32 %v925, 4294901760
    %1988 = vmatmul.f32.gmra.mxu0 %v1987
    %v1989 = vpop.f32.mrf.mxu0
    %v1990 = vadd.f32 %v1968, %v1989
    %1991 = vdwg.mxu0
    %v1992 = vmul.f32 %v1550, %v1550
    %v1993 = vmul.f32 %v1696, %v1696
    %v1994 = vadd.f32 %v1992, %v1993
    %v1995 = vmul.f32 %v1844, %v1844
    %v1996 = vadd.f32 %v1994, %v1995
    %v1997 = vmul.f32 %v1990, %v1990
    %v1998 = vadd.f32 %v1996, %v1997
    %s1999 = scalar_lea.vmem [#allocation7], 4
    %2000 = vst.msk [vmem:[%s1999] sm:$0xf] %vm1080, %v1998
    // Predicated region
    $region42: #{tpu_custom_call.1} parent=1 // pred_check
      _
    $region43: #{tpu_custom_call.1} parent=1 // pred_check_branch
      %2002 = sbr.rel (0) target = $region45
    $region44: #{tpu_custom_call.1} parent=1 // pred_region
      %2004 = vsyncadd [#allocation4], 0
      %s2005 = sshll.u32 [#allocation7], 4
      %s2006 = int_to_ptr.vmem [resolvable:$true] %s2005
      %s2007 = sshll.u32 %s8, 4
      %s2008 = int_to_ptr.hbm [resolvable:$true] %s2007
      %2013 = dma.vmem_to_hbm [thread:$0]  %s2006, 128, %s2008, [#allocation4], 64, 64, 4
    $region45: #{tpu_custom_call.1} parent=1 // pred_fallthru
      _
    // Predicated region
    $region46: #{tpu_custom_call.1} parent=1 // pred_check
      _
    $region47: #{tpu_custom_call.1} parent=1 // pred_check_branch
      %2015 = sbr.rel (0) target = $region49
    $region48: #{tpu_custom_call.1} parent=1 // pred_region
      %2017 = dma.done [#allocation4], 128
    $region49: #{tpu_custom_call.1} parent=1 // pred_fallthru
      _
    %2018 = vsyncpa [#allocation3], 1
    %2019 = vsyncpa [#allocation6], 1
    %2020 = vsyncpa [#allocation4], 1

</llo_original>
